<compile_context>
chip_gen: v6e
topology: v6e:2x2x1
jax: 0.10.0
libtpu: 0.0.40
codegen_flags: <defaults>
</compile_context>

<pallas_src>
import functools

import jax
import jax.numpy as jnp
from jax.experimental import pallas as pl
from jax.experimental.pallas import tpu as pltpu


def _sigmoid(x):
    # Single EUP transcendental (tanh) instead of exp + reciprocal.
    return 0.5 * (jnp.tanh(0.5 * x) + 1.0)


def encoder_kernel(ids_ref, emb_ref, w_ref, b_ref, lw_ref, lb_ref, out_ref,
                   *, seq_len, batch, hidden, num_layers):
    """All-in-VMEM encoder forward.

    ids_ref : SMEM [T*B]       int32 token ids, row r corresponds to (t, b) = (r//B, r%B)
    emb_ref : VMEM [V, H]      embedding table (gathered in-VMEM with dynamic slices)
    w_ref   : VMEM [L, 2H, 4H] stacked [Wih; Whh] weights, gates packed (i, f, o, g)
    b_ref   : VMEM [L, 1, 4H]  combined bias (b_ih + b_hh), same gate packing
    lw_ref  : VMEM [1, H]      final linear weight row
    lb_ref  : VMEM [1, 1]      final linear bias
    out_ref : VMEM [T, 1]      output
    """
    T, B, H, L = seq_len, batch, hidden, num_layers

    # ---- Hoist per-layer parameters (loop invariant over the wave loop).
    w_l = [w_ref[l] for l in range(L)]          # [2H, 4H] each
    b_l = [b_ref[l] for l in range(L)]          # [1, 4H] each
    lw_row = lw_ref[...]                        # [1, H]

    # ---- Fused embedding gather: SMEM scalar ids index the VMEM table directly.
    # No per-row HBM DMAs, no semaphores, no partial-tile VMEM writes.
    x0 = []
    for t in range(T):
        rows = [emb_ref[pl.ds(ids_ref[t * B + bb], 1), :] for bb in range(B)]
        x0.append(jnp.concatenate(rows, axis=0))          # [B, H]

    # ---- Wavefront-pipelined multi-layer LSTM (zero initial state).
    # Wave w runs layer l at timestep t = w - l; layer l+1 consumes layer l's output
    # produced one wave earlier, so independent (layer, step) work overlaps and the
    # serial chain is T + L - 1 steps instead of T * L.
    h = [jnp.zeros((B, H), jnp.float32) for _ in range(L)]
    c = [jnp.zeros((B, H), jnp.float32) for _ in range(L)]
    x_pending = [None] * L                      # input for layer l, produced last wave
    last_rows = []

    # TODO(synk): for large T, replace this unrolled wave loop with a
    # lax.fori_loop(unroll=4) carrying (h, c) and pl.ds(t*B, B) slices.
    for wv in range(T + L - 1):
        x_wave = list(x_pending)                # snapshot inputs from the previous wave
        for l in range(L):
            t = wv - l
            if not (0 <= t < T):
                continue
            x_in = x0[t] if l == 0 else x_wave[l]

            # One fused MXU op per (layer, step): [B, 2H] @ [2H, 4H] -> [B, 4H].
            xz = jnp.concatenate([x_in, h[l]], axis=1)            # [B, 2H]
            gates = jnp.dot(xz, w_l[l],
                            preferred_element_type=jnp.float32) + b_l[l]

            # Gate packing (i, f, o, g): one sigmoid over [B, 3H], one tanh over [B, H].
            sig = _sigmoid(gates[:, :3 * H])
            i_g = sig[:, 0:H]
            f_g = sig[:, H:2 * H]
            o_g = sig[:, 2 * H:3 * H]
            g_g = jnp.tanh(gates[:, 3 * H:])

            c[l] = f_g * c[l] + i_g * g_g
            h[l] = o_g * jnp.tanh(c[l])

            if l + 1 < L:
                x_pending[l + 1] = h[l]         # feeds layer l+1 on the next wave
            else:
                # PyTorch `x[:, -1, :]`: keep only the last batch element per timestep.
                last_rows.append(h[l][B - 1:B, :])                # [1, H]

    # ---- Linear(H, 1): broadcast-multiply + lane reduce (no N=1 MXU matmul).
    last = jnp.concatenate(last_rows, axis=0)                     # [T, H]
    out_ref[...] = (jnp.sum(last * lw_row, axis=-1, keepdims=True)
                    + lb_ref[...])                                # [T, 1]


def pack_lstm_params(W_ih, W_hh, b_ih, b_hh):
    """Repack PyTorch-order LSTM params (gate order i,f,g,o along the 4H rows) into
    the kernel layout: stacked [L, 2H, 4H] (rows 0:H = Wih, H:2H = Whh, x@W form)
    with gates packed (i, f, o, g), and combined bias [L, 1, 4H]."""
    L, fourH, H = W_ih.shape
    assert fourH == 4 * H
    perm = jnp.concatenate([
        jnp.arange(0, H),            # i
        jnp.arange(H, 2 * H),        # f
        jnp.arange(3 * H, 4 * H),    # o
        jnp.arange(2 * H, 3 * H),    # g
    ])
    wih_p = jnp.transpose(W_ih[:, perm, :], (0, 2, 1))    # [L, H, 4H]
    whh_p = jnp.transpose(W_hh[:, perm, :], (0, 2, 1))    # [L, H, 4H]
    w_p = jnp.concatenate([wih_p, whh_p], axis=1)         # [L, 2H, 4H]
    bias_p = (b_ih + b_hh)[:, perm][:, None, :]           # [L, 1, 4H]
    return w_p, bias_p


def encoder_forward(x_tokens, embeddings, w_p, bias_p, lw, lb):
    """x_tokens: int32 [seq_len, batch]; returns float32 [seq_len, 1]."""
    T, B = x_tokens.shape
    H = embeddings.shape[1]
    L = w_p.shape[0]

    ids = x_tokens.reshape(T * B).astype(jnp.int32)       # row r == (t, b) = (r//B, r%B)
    lw2 = lw.reshape(1, H).astype(jnp.float32)
    lb2 = lb.reshape(1, 1).astype(jnp.float32)

    kernel = functools.partial(encoder_kernel, seq_len=T, batch=B,
                               hidden=H, num_layers=L)
    vmem = pl.BlockSpec(memory_space=pltpu.MemorySpace.VMEM)
    smem = pl.BlockSpec(memory_space=pltpu.MemorySpace.SMEM)

    return pl.pallas_call(
        kernel,
        out_shape=jax.ShapeDtypeStruct((T, 1), jnp.float32),
        in_specs=[smem, vmem, vmem, vmem, vmem, vmem],
        out_specs=vmem,
    )(ids, embeddings.astype(jnp.float32), w_p, bias_p, lw2, lb2)


def reference_forward(x_tokens, embeddings, W_ih, W_hh, b_ih, b_hh, lw, lb):
    """Pure-JAX reference mirroring torch.nn.LSTM semantics (gate order i,f,g,o)."""
    emb = embeddings[x_tokens]  # [T, B, H]
    T, B, H = emb.shape
    L = W_ih.shape[0]
    xs = emb
    for l in range(L):
        h = jnp.zeros((B, H), jnp.float32)
        c = jnp.zeros((B, H), jnp.float32)
        outs = []
        for t in range(T):
            gates = xs[t] @ W_ih[l].T + b_ih[l] + h @ W_hh[l].T + b_hh[l]
            i = jax.nn.sigmoid(gates[:, 0:H])
            f = jax.nn.sigmoid(gates[:, H:2 * H])
            g = jnp.tanh(gates[:, 2 * H:3 * H])
            o = jax.nn.sigmoid(gates[:, 3 * H:4 * H])
            c = f * c + i * g
            h = o * jnp.tanh(c)
            outs.append(h)
        xs = jnp.stack(outs, axis=0)
    sel = xs[:, -1, :]          # last batch element, all timesteps -> [T, H]
    return sel @ lw.T + lb      # [T, 1]


if __name__ == "__main__":
    vocab, hidden, num_layers = 16, 32, 2
    seq_len, batch = 8, 2

    key = jax.random.PRNGKey(0)
    ks = jax.random.split(key, 8)
    scale = 1.0 / jnp.sqrt(jnp.float32(hidden))

    # Frozen embedding table (the module's `embeddings` argument).
    embeddings = jax.random.normal(ks[0], (vocab, hidden), jnp.float32)

    # nn.LSTM parameters (input_size == hidden_size, so one shape works for all layers).
    W_ih = jax.random.uniform(ks[1], (num_layers, 4 * hidden, hidden),
                              minval=-scale, maxval=scale, dtype=jnp.float32)
    W_hh = jax.random.uniform(ks[2], (num_layers, 4 * hidden, hidden),
                              minval=-scale, maxval=scale, dtype=jnp.float32)
    b_ih = jax.random.uniform(ks[3], (num_layers, 4 * hidden),
                              minval=-scale, maxval=scale, dtype=jnp.float32)
    b_hh = jax.random.uniform(ks[4], (num_layers, 4 * hidden),
                              minval=-scale, maxval=scale, dtype=jnp.float32)

    # nn.Linear(hidden, 1)
    lw = jax.random.uniform(ks[5], (1, hidden), minval=-scale, maxval=scale,
                            dtype=jnp.float32)
    lb = jax.random.uniform(ks[6], (1,), minval=-scale, maxval=scale,
                            dtype=jnp.float32)

    # Kernel-friendly, gate-fused, input/hidden-stacked parameter layout.
    w_p, bias_p = pack_lstm_params(W_ih, W_hh, b_ih, b_hh)

    # x: [seq_len, batch] integer token ids.
    x_tokens = jax.random.randint(ks[7], (seq_len, batch), 0, vocab, dtype=jnp.int32)

    out = encoder_forward(x_tokens, embeddings, w_p, bias_p, lw, lb)
    out = jax.block_until_ready(out)

    ref = reference_forward(x_tokens, embeddings, W_ih, W_hh, b_ih, b_hh, lw, lb)
    assert out.shape == (seq_len, 1), out.shape
    assert jnp.allclose(out, ref, atol=1e-4, rtol=1e-4), (out, ref)

    print("KERNEL_OK")
</pallas_src>

<mosaic_0001>
module attributes {stable_mosaic.version = 11 : i64} {
  func.func @encoder_kernel(%arg0: memref<16xi32, #tpu.memory_space<smem>>, %arg1: memref<16x32xf32, #tpu.memory_space<vmem>>, %arg2: memref<2x64x128xf32, #tpu.memory_space<vmem>>, %arg3: memref<2x1x128xf32, #tpu.memory_space<vmem>>, %arg4: memref<1x32xf32, #tpu.memory_space<vmem>>, %arg5: memref<1x1xf32, #tpu.memory_space<vmem>>, %arg6: memref<8x1xf32, #tpu.memory_space<vmem>>) attributes {dimension_semantics = [], scalar_prefetch = 0 : i64, scratch_operands = 0 : i64, tpu.core_type = #tpu.core_type<tc>} {
    %c0 = arith.constant 0 : index
    %c0_0 = arith.constant 0 : index
    %c0_1 = arith.constant 0 : index
    %0 = vector.load %arg2[%c0, %c0_0, %c0_1] : memref<2x64x128xf32, #tpu.memory_space<vmem>>, vector<1x64x128xf32>
    %1 = vector.shape_cast %0 : vector<1x64x128xf32> to vector<64x128xf32>
    %c1 = arith.constant 1 : index
    %c0_2 = arith.constant 0 : index
    %c0_3 = arith.constant 0 : index
    %2 = vector.load %arg2[%c1, %c0_2, %c0_3] : memref<2x64x128xf32, #tpu.memory_space<vmem>>, vector<1x64x128xf32>
    %3 = vector.shape_cast %2 : vector<1x64x128xf32> to vector<64x128xf32>
    %c0_4 = arith.constant 0 : index
    %c0_5 = arith.constant 0 : index
    %c0_6 = arith.constant 0 : index
    %4 = vector.load %arg3[%c0_4, %c0_5, %c0_6] : memref<2x1x128xf32, #tpu.memory_space<vmem>>, vector<1x1x128xf32>
    %5 = vector.shape_cast %4 : vector<1x1x128xf32> to vector<1x128xf32>
    %c1_7 = arith.constant 1 : index
    %c0_8 = arith.constant 0 : index
    %c0_9 = arith.constant 0 : index
    %6 = vector.load %arg3[%c1_7, %c0_8, %c0_9] : memref<2x1x128xf32, #tpu.memory_space<vmem>>, vector<1x1x128xf32>
    %7 = vector.shape_cast %6 : vector<1x1x128xf32> to vector<1x128xf32>
    %c0_10 = arith.constant 0 : index
    %c0_11 = arith.constant 0 : index
    %8 = vector.load %arg4[%c0_10, %c0_11] : memref<1x32xf32, #tpu.memory_space<vmem>>, vector<1x32xf32>
    %c0_12 = arith.constant 0 : index
    %9 = memref.load %arg0[%c0_12] : memref<16xi32, #tpu.memory_space<smem>>
    %10 = arith.index_cast %9 : i32 to index
    %c0_13 = arith.constant 0 : index
    %11 = vector.load %arg1[%10, %c0_13] : memref<16x32xf32, #tpu.memory_space<vmem>>, vector<1x32xf32>
    %c1_14 = arith.constant 1 : index
    %12 = memref.load %arg0[%c1_14] : memref<16xi32, #tpu.memory_space<smem>>
    %13 = arith.index_cast %12 : i32 to index
    %c0_15 = arith.constant 0 : index
    %14 = vector.load %arg1[%13, %c0_15] : memref<16x32xf32, #tpu.memory_space<vmem>>, vector<1x32xf32>
    %15 = tpu.concatenate %11, %14 in 0 : vector<1x32xf32>, vector<1x32xf32> -> vector<2x32xf32>
    %c2 = arith.constant 2 : index
    %16 = memref.load %arg0[%c2] : memref<16xi32, #tpu.memory_space<smem>>
    %17 = arith.index_cast %16 : i32 to index
    %c0_16 = arith.constant 0 : index
    %18 = vector.load %arg1[%17, %c0_16] : memref<16x32xf32, #tpu.memory_space<vmem>>, vector<1x32xf32>
    %c3 = arith.constant 3 : index
    %19 = memref.load %arg0[%c3] : memref<16xi32, #tpu.memory_space<smem>>
    %20 = arith.index_cast %19 : i32 to index
    %c0_17 = arith.constant 0 : index
    %21 = vector.load %arg1[%20, %c0_17] : memref<16x32xf32, #tpu.memory_space<vmem>>, vector<1x32xf32>
    %22 = tpu.concatenate %18, %21 in 0 : vector<1x32xf32>, vector<1x32xf32> -> vector<2x32xf32>
    %c4 = arith.constant 4 : index
    %23 = memref.load %arg0[%c4] : memref<16xi32, #tpu.memory_space<smem>>
    %24 = arith.index_cast %23 : i32 to index
    %c0_18 = arith.constant 0 : index
    %25 = vector.load %arg1[%24, %c0_18] : memref<16x32xf32, #tpu.memory_space<vmem>>, vector<1x32xf32>
    %c5 = arith.constant 5 : index
    %26 = memref.load %arg0[%c5] : memref<16xi32, #tpu.memory_space<smem>>
    %27 = arith.index_cast %26 : i32 to index
    %c0_19 = arith.constant 0 : index
    %28 = vector.load %arg1[%27, %c0_19] : memref<16x32xf32, #tpu.memory_space<vmem>>, vector<1x32xf32>
    %29 = tpu.concatenate %25, %28 in 0 : vector<1x32xf32>, vector<1x32xf32> -> vector<2x32xf32>
    %c6 = arith.constant 6 : index
    %30 = memref.load %arg0[%c6] : memref<16xi32, #tpu.memory_space<smem>>
    %31 = arith.index_cast %30 : i32 to index
    %c0_20 = arith.constant 0 : index
    %32 = vector.load %arg1[%31, %c0_20] : memref<16x32xf32, #tpu.memory_space<vmem>>, vector<1x32xf32>
    %c7 = arith.constant 7 : index
    %33 = memref.load %arg0[%c7] : memref<16xi32, #tpu.memory_space<smem>>
    %34 = arith.index_cast %33 : i32 to index
    %c0_21 = arith.constant 0 : index
    %35 = vector.load %arg1[%34, %c0_21] : memref<16x32xf32, #tpu.memory_space<vmem>>, vector<1x32xf32>
    %36 = tpu.concatenate %32, %35 in 0 : vector<1x32xf32>, vector<1x32xf32> -> vector<2x32xf32>
    %c8 = arith.constant 8 : index
    %37 = memref.load %arg0[%c8] : memref<16xi32, #tpu.memory_space<smem>>
    %38 = arith.index_cast %37 : i32 to index
    %c0_22 = arith.constant 0 : index
    %39 = vector.load %arg1[%38, %c0_22] : memref<16x32xf32, #tpu.memory_space<vmem>>, vector<1x32xf32>
    %c9 = arith.constant 9 : index
    %40 = memref.load %arg0[%c9] : memref<16xi32, #tpu.memory_space<smem>>
    %41 = arith.index_cast %40 : i32 to index
    %c0_23 = arith.constant 0 : index
    %42 = vector.load %arg1[%41, %c0_23] : memref<16x32xf32, #tpu.memory_space<vmem>>, vector<1x32xf32>
    %43 = tpu.concatenate %39, %42 in 0 : vector<1x32xf32>, vector<1x32xf32> -> vector<2x32xf32>
    %c10 = arith.constant 10 : index
    %44 = memref.load %arg0[%c10] : memref<16xi32, #tpu.memory_space<smem>>
    %45 = arith.index_cast %44 : i32 to index
    %c0_24 = arith.constant 0 : index
    %46 = vector.load %arg1[%45, %c0_24] : memref<16x32xf32, #tpu.memory_space<vmem>>, vector<1x32xf32>
    %c11 = arith.constant 11 : index
    %47 = memref.load %arg0[%c11] : memref<16xi32, #tpu.memory_space<smem>>
    %48 = arith.index_cast %47 : i32 to index
    %c0_25 = arith.constant 0 : index
    %49 = vector.load %arg1[%48, %c0_25] : memref<16x32xf32, #tpu.memory_space<vmem>>, vector<1x32xf32>
    %50 = tpu.concatenate %46, %49 in 0 : vector<1x32xf32>, vector<1x32xf32> -> vector<2x32xf32>
    %c12 = arith.constant 12 : index
    %51 = memref.load %arg0[%c12] : memref<16xi32, #tpu.memory_space<smem>>
    %52 = arith.index_cast %51 : i32 to index
    %c0_26 = arith.constant 0 : index
    %53 = vector.load %arg1[%52, %c0_26] : memref<16x32xf32, #tpu.memory_space<vmem>>, vector<1x32xf32>
    %c13 = arith.constant 13 : index
    %54 = memref.load %arg0[%c13] : memref<16xi32, #tpu.memory_space<smem>>
    %55 = arith.index_cast %54 : i32 to index
    %c0_27 = arith.constant 0 : index
    %56 = vector.load %arg1[%55, %c0_27] : memref<16x32xf32, #tpu.memory_space<vmem>>, vector<1x32xf32>
    %57 = tpu.concatenate %53, %56 in 0 : vector<1x32xf32>, vector<1x32xf32> -> vector<2x32xf32>
    %c14 = arith.constant 14 : index
    %58 = memref.load %arg0[%c14] : memref<16xi32, #tpu.memory_space<smem>>
    %59 = arith.index_cast %58 : i32 to index
    %c0_28 = arith.constant 0 : index
    %60 = vector.load %arg1[%59, %c0_28] : memref<16x32xf32, #tpu.memory_space<vmem>>, vector<1x32xf32>
    %c15 = arith.constant 15 : index
    %61 = memref.load %arg0[%c15] : memref<16xi32, #tpu.memory_space<smem>>
    %62 = arith.index_cast %61 : i32 to index
    %c0_29 = arith.constant 0 : index
    %63 = vector.load %arg1[%62, %c0_29] : memref<16x32xf32, #tpu.memory_space<vmem>>, vector<1x32xf32>
    %64 = tpu.concatenate %60, %63 in 0 : vector<1x32xf32>, vector<1x32xf32> -> vector<2x32xf32>
    %cst = arith.constant 0.000000e+00 : f32
    %65 = vector.broadcast %cst : f32 to vector<2x32xf32>
    %cst_30 = arith.constant 0.000000e+00 : f32
    %66 = vector.broadcast %cst_30 : f32 to vector<2x32xf32>
    %cst_31 = arith.constant 0.000000e+00 : f32
    %67 = vector.broadcast %cst_31 : f32 to vector<2x32xf32>
    %cst_32 = arith.constant 0.000000e+00 : f32
    %68 = vector.broadcast %cst_32 : f32 to vector<2x32xf32>
    %69 = tpu.concatenate %15, %65 in 1 : vector<2x32xf32>, vector<2x32xf32> -> vector<2x64xf32>
    %cst_33 = arith.constant dense<0.000000e+00> : vector<2x128xf32>
    %70 = tpu.matmul %69, %1, %cst_33 {dimension_numbers = #tpu.dot_dimension_numbers<[1], [0], [0], [1], [0, 0, 1, 1], [], []>} : vector<2x64xf32>, vector<64x128xf32>, vector<2x128xf32> -> vector<2x128xf32>
    %71 = vector.broadcast %5 : vector<1x128xf32> to vector<2x128xf32>
    %72 = arith.addf %70, %71 : vector<2x128xf32>
    %73 = vector.extract_strided_slice %72 {offsets = [0, 0], sizes = [2, 96], strides = [1, 1]} : vector<2x128xf32> to vector<2x96xf32>
    %cst_34 = arith.constant 5.000000e-01 : f32
    %74 = vector.broadcast %cst_34 : f32 to vector<2x96xf32>
    %75 = arith.mulf %74, %73 : vector<2x96xf32>
    %76 = math.tanh %75 : vector<2x96xf32>
    %cst_35 = arith.constant 1.000000e+00 : f32
    %77 = vector.broadcast %cst_35 : f32 to vector<2x96xf32>
    %78 = arith.addf %76, %77 : vector<2x96xf32>
    %cst_36 = arith.constant 5.000000e-01 : f32
    %79 = vector.broadcast %cst_36 : f32 to vector<2x96xf32>
    %80 = arith.mulf %79, %78 : vector<2x96xf32>
    %81 = vector.extract_strided_slice %80 {offsets = [0, 0], sizes = [2, 32], strides = [1, 1]} : vector<2x96xf32> to vector<2x32xf32>
    %82 = vector.extract_strided_slice %80 {offsets = [0, 32], sizes = [2, 32], strides = [1, 1]} : vector<2x96xf32> to vector<2x32xf32>
    %83 = vector.extract_strided_slice %80 {offsets = [0, 64], sizes = [2, 32], strides = [1, 1]} : vector<2x96xf32> to vector<2x32xf32>
    %84 = vector.extract_strided_slice %72 {offsets = [0, 96], sizes = [2, 32], strides = [1, 1]} : vector<2x128xf32> to vector<2x32xf32>
    %85 = math.tanh %84 : vector<2x32xf32>
    %86 = arith.mulf %82, %67 : vector<2x32xf32>
    %87 = arith.mulf %81, %85 : vector<2x32xf32>
    %88 = arith.addf %86, %87 : vector<2x32xf32>
    %89 = math.tanh %88 : vector<2x32xf32>
    %90 = arith.mulf %83, %89 : vector<2x32xf32>
    %91 = tpu.concatenate %22, %90 in 1 : vector<2x32xf32>, vector<2x32xf32> -> vector<2x64xf32>
    %cst_37 = arith.constant dense<0.000000e+00> : vector<2x128xf32>
    %92 = tpu.matmul %91, %1, %cst_37 {dimension_numbers = #tpu.dot_dimension_numbers<[1], [0], [0], [1], [0, 0, 1, 1], [], []>} : vector<2x64xf32>, vector<64x128xf32>, vector<2x128xf32> -> vector<2x128xf32>
    %93 = vector.broadcast %5 : vector<1x128xf32> to vector<2x128xf32>
    %94 = arith.addf %92, %93 : vector<2x128xf32>
    %95 = vector.extract_strided_slice %94 {offsets = [0, 0], sizes = [2, 96], strides = [1, 1]} : vector<2x128xf32> to vector<2x96xf32>
    %cst_38 = arith.constant 5.000000e-01 : f32
    %96 = vector.broadcast %cst_38 : f32 to vector<2x96xf32>
    %97 = arith.mulf %96, %95 : vector<2x96xf32>
    %98 = math.tanh %97 : vector<2x96xf32>
    %cst_39 = arith.constant 1.000000e+00 : f32
    %99 = vector.broadcast %cst_39 : f32 to vector<2x96xf32>
    %100 = arith.addf %98, %99 : vector<2x96xf32>
    %cst_40 = arith.constant 5.000000e-01 : f32
    %101 = vector.broadcast %cst_40 : f32 to vector<2x96xf32>
    %102 = arith.mulf %101, %100 : vector<2x96xf32>
    %103 = vector.extract_strided_slice %102 {offsets = [0, 0], sizes = [2, 32], strides = [1, 1]} : vector<2x96xf32> to vector<2x32xf32>
    %104 = vector.extract_strided_slice %102 {offsets = [0, 32], sizes = [2, 32], strides = [1, 1]} : vector<2x96xf32> to vector<2x32xf32>
    %105 = vector.extract_strided_slice %102 {offsets = [0, 64], sizes = [2, 32], strides = [1, 1]} : vector<2x96xf32> to vector<2x32xf32>
    %106 = vector.extract_strided_slice %94 {offsets = [0, 96], sizes = [2, 32], strides = [1, 1]} : vector<2x128xf32> to vector<2x32xf32>
    %107 = math.tanh %106 : vector<2x32xf32>
    %108 = arith.mulf %104, %88 : vector<2x32xf32>
    %109 = arith.mulf %103, %107 : vector<2x32xf32>
    %110 = arith.addf %108, %109 : vector<2x32xf32>
    %111 = math.tanh %110 : vector<2x32xf32>
    %112 = arith.mulf %105, %111 : vector<2x32xf32>
    %113 = tpu.concatenate %90, %66 in 1 : vector<2x32xf32>, vector<2x32xf32> -> vector<2x64xf32>
    %cst_41 = arith.constant dense<0.000000e+00> : vector<2x128xf32>
    %114 = tpu.matmul %113, %3, %cst_41 {dimension_numbers = #tpu.dot_dimension_numbers<[1], [0], [0], [1], [0, 0, 1, 1], [], []>} : vector<2x64xf32>, vector<64x128xf32>, vector<2x128xf32> -> vector<2x128xf32>
    %115 = vector.broadcast %7 : vector<1x128xf32> to vector<2x128xf32>
    %116 = arith.addf %114, %115 : vector<2x128xf32>
    %117 = vector.extract_strided_slice %116 {offsets = [0, 0], sizes = [2, 96], strides = [1, 1]} : vector<2x128xf32> to vector<2x96xf32>
    %cst_42 = arith.constant 5.000000e-01 : f32
    %118 = vector.broadcast %cst_42 : f32 to vector<2x96xf32>
    %119 = arith.mulf %118, %117 : vector<2x96xf32>
    %120 = math.tanh %119 : vector<2x96xf32>
    %cst_43 = arith.constant 1.000000e+00 : f32
    %121 = vector.broadcast %cst_43 : f32 to vector<2x96xf32>
    %122 = arith.addf %120, %121 : vector<2x96xf32>
    %cst_44 = arith.constant 5.000000e-01 : f32
    %123 = vector.broadcast %cst_44 : f32 to vector<2x96xf32>
    %124 = arith.mulf %123, %122 : vector<2x96xf32>
    %125 = vector.extract_strided_slice %124 {offsets = [0, 0], sizes = [2, 32], strides = [1, 1]} : vector<2x96xf32> to vector<2x32xf32>
    %126 = vector.extract_strided_slice %124 {offsets = [0, 32], sizes = [2, 32], strides = [1, 1]} : vector<2x96xf32> to vector<2x32xf32>
    %127 = vector.extract_strided_slice %124 {offsets = [0, 64], sizes = [2, 32], strides = [1, 1]} : vector<2x96xf32> to vector<2x32xf32>
    %128 = vector.extract_strided_slice %116 {offsets = [0, 96], sizes = [2, 32], strides = [1, 1]} : vector<2x128xf32> to vector<2x32xf32>
    %129 = math.tanh %128 : vector<2x32xf32>
    %130 = arith.mulf %126, %68 : vector<2x32xf32>
    %131 = arith.mulf %125, %129 : vector<2x32xf32>
    %132 = arith.addf %130, %131 : vector<2x32xf32>
    %133 = math.tanh %132 : vector<2x32xf32>
    %134 = arith.mulf %127, %133 : vector<2x32xf32>
    %135 = vector.extract_strided_slice %134 {offsets = [1, 0], sizes = [1, 32], strides = [1, 1]} : vector<2x32xf32> to vector<1x32xf32>
    %136 = tpu.concatenate %29, %112 in 1 : vector<2x32xf32>, vector<2x32xf32> -> vector<2x64xf32>
    %cst_45 = arith.constant dense<0.000000e+00> : vector<2x128xf32>
    %137 = tpu.matmul %136, %1, %cst_45 {dimension_numbers = #tpu.dot_dimension_numbers<[1], [0], [0], [1], [0, 0, 1, 1], [], []>} : vector<2x64xf32>, vector<64x128xf32>, vector<2x128xf32> -> vector<2x128xf32>
    %138 = vector.broadcast %5 : vector<1x128xf32> to vector<2x128xf32>
    %139 = arith.addf %137, %138 : vector<2x128xf32>
    %140 = vector.extract_strided_slice %139 {offsets = [0, 0], sizes = [2, 96], strides = [1, 1]} : vector<2x128xf32> to vector<2x96xf32>
    %cst_46 = arith.constant 5.000000e-01 : f32
    %141 = vector.broadcast %cst_46 : f32 to vector<2x96xf32>
    %142 = arith.mulf %141, %140 : vector<2x96xf32>
    %143 = math.tanh %142 : vector<2x96xf32>
    %cst_47 = arith.constant 1.000000e+00 : f32
    %144 = vector.broadcast %cst_47 : f32 to vector<2x96xf32>
    %145 = arith.addf %143, %144 : vector<2x96xf32>
    %cst_48 = arith.constant 5.000000e-01 : f32
    %146 = vector.broadcast %cst_48 : f32 to vector<2x96xf32>
    %147 = arith.mulf %146, %145 : vector<2x96xf32>
    %148 = vector.extract_strided_slice %147 {offsets = [0, 0], sizes = [2, 32], strides = [1, 1]} : vector<2x96xf32> to vector<2x32xf32>
    %149 = vector.extract_strided_slice %147 {offsets = [0, 32], sizes = [2, 32], strides = [1, 1]} : vector<2x96xf32> to vector<2x32xf32>
    %150 = vector.extract_strided_slice %147 {offsets = [0, 64], sizes = [2, 32], strides = [1, 1]} : vector<2x96xf32> to vector<2x32xf32>
    %151 = vector.extract_strided_slice %139 {offsets = [0, 96], sizes = [2, 32], strides = [1, 1]} : vector<2x128xf32> to vector<2x32xf32>
    %152 = math.tanh %151 : vector<2x32xf32>
    %153 = arith.mulf %149, %110 : vector<2x32xf32>
    %154 = arith.mulf %148, %152 : vector<2x32xf32>
    %155 = arith.addf %153, %154 : vector<2x32xf32>
    %156 = math.tanh %155 : vector<2x32xf32>
    %157 = arith.mulf %150, %156 : vector<2x32xf32>
    %158 = tpu.concatenate %112, %134 in 1 : vector<2x32xf32>, vector<2x32xf32> -> vector<2x64xf32>
    %cst_49 = arith.constant dense<0.000000e+00> : vector<2x128xf32>
    %159 = tpu.matmul %158, %3, %cst_49 {dimension_numbers = #tpu.dot_dimension_numbers<[1], [0], [0], [1], [0, 0, 1, 1], [], []>} : vector<2x64xf32>, vector<64x128xf32>, vector<2x128xf32> -> vector<2x128xf32>
    %160 = vector.broadcast %7 : vector<1x128xf32> to vector<2x128xf32>
    %161 = arith.addf %159, %160 : vector<2x128xf32>
    %162 = vector.extract_strided_slice %161 {offsets = [0, 0], sizes = [2, 96], strides = [1, 1]} : vector<2x128xf32> to vector<2x96xf32>
    %cst_50 = arith.constant 5.000000e-01 : f32
    %163 = vector.broadcast %cst_50 : f32 to vector<2x96xf32>
    %164 = arith.mulf %163, %162 : vector<2x96xf32>
    %165 = math.tanh %164 : vector<2x96xf32>
    %cst_51 = arith.constant 1.000000e+00 : f32
    %166 = vector.broadcast %cst_51 : f32 to vector<2x96xf32>
    %167 = arith.addf %165, %166 : vector<2x96xf32>
    %cst_52 = arith.constant 5.000000e-01 : f32
    %168 = vector.broadcast %cst_52 : f32 to vector<2x96xf32>
    %169 = arith.mulf %168, %167 : vector<2x96xf32>
    %170 = vector.extract_strided_slice %169 {offsets = [0, 0], sizes = [2, 32], strides = [1, 1]} : vector<2x96xf32> to vector<2x32xf32>
    %171 = vector.extract_strided_slice %169 {offsets = [0, 32], sizes = [2, 32], strides = [1, 1]} : vector<2x96xf32> to vector<2x32xf32>
    %172 = vector.extract_strided_slice %169 {offsets = [0, 64], sizes = [2, 32], strides = [1, 1]} : vector<2x96xf32> to vector<2x32xf32>
    %173 = vector.extract_strided_slice %161 {offsets = [0, 96], sizes = [2, 32], strides = [1, 1]} : vector<2x128xf32> to vector<2x32xf32>
    %174 = math.tanh %173 : vector<2x32xf32>
    %175 = arith.mulf %171, %132 : vector<2x32xf32>
    %176 = arith.mulf %170, %174 : vector<2x32xf32>
    %177 = arith.addf %175, %176 : vector<2x32xf32>
    %178 = math.tanh %177 : vector<2x32xf32>
    %179 = arith.mulf %172, %178 : vector<2x32xf32>
    %180 = vector.extract_strided_slice %179 {offsets = [1, 0], sizes = [1, 32], strides = [1, 1]} : vector<2x32xf32> to vector<1x32xf32>
    %181 = tpu.concatenate %36, %157 in 1 : vector<2x32xf32>, vector<2x32xf32> -> vector<2x64xf32>
    %cst_53 = arith.constant dense<0.000000e+00> : vector<2x128xf32>
    %182 = tpu.matmul %181, %1, %cst_53 {dimension_numbers = #tpu.dot_dimension_numbers<[1], [0], [0], [1], [0, 0, 1, 1], [], []>} : vector<2x64xf32>, vector<64x128xf32>, vector<2x128xf32> -> vector<2x128xf32>
    %183 = vector.broadcast %5 : vector<1x128xf32> to vector<2x128xf32>
    %184 = arith.addf %182, %183 : vector<2x128xf32>
    %185 = vector.extract_strided_slice %184 {offsets = [0, 0], sizes = [2, 96], strides = [1, 1]} : vector<2x128xf32> to vector<2x96xf32>
    %cst_54 = arith.constant 5.000000e-01 : f32
    %186 = vector.broadcast %cst_54 : f32 to vector<2x96xf32>
    %187 = arith.mulf %186, %185 : vector<2x96xf32>
    %188 = math.tanh %187 : vector<2x96xf32>
    %cst_55 = arith.constant 1.000000e+00 : f32
    %189 = vector.broadcast %cst_55 : f32 to vector<2x96xf32>
    %190 = arith.addf %188, %189 : vector<2x96xf32>
    %cst_56 = arith.constant 5.000000e-01 : f32
    %191 = vector.broadcast %cst_56 : f32 to vector<2x96xf32>
    %192 = arith.mulf %191, %190 : vector<2x96xf32>
    %193 = vector.extract_strided_slice %192 {offsets = [0, 0], sizes = [2, 32], strides = [1, 1]} : vector<2x96xf32> to vector<2x32xf32>
    %194 = vector.extract_strided_slice %192 {offsets = [0, 32], sizes = [2, 32], strides = [1, 1]} : vector<2x96xf32> to vector<2x32xf32>
    %195 = vector.extract_strided_slice %192 {offsets = [0, 64], sizes = [2, 32], strides = [1, 1]} : vector<2x96xf32> to vector<2x32xf32>
    %196 = vector.extract_strided_slice %184 {offsets = [0, 96], sizes = [2, 32], strides = [1, 1]} : vector<2x128xf32> to vector<2x32xf32>
    %197 = math.tanh %196 : vector<2x32xf32>
    %198 = arith.mulf %194, %155 : vector<2x32xf32>
    %199 = arith.mulf %193, %197 : vector<2x32xf32>
    %200 = arith.addf %198, %199 : vector<2x32xf32>
    %201 = math.tanh %200 : vector<2x32xf32>
    %202 = arith.mulf %195, %201 : vector<2x32xf32>
    %203 = tpu.concatenate %157, %179 in 1 : vector<2x32xf32>, vector<2x32xf32> -> vector<2x64xf32>
    %cst_57 = arith.constant dense<0.000000e+00> : vector<2x128xf32>
    %204 = tpu.matmul %203, %3, %cst_57 {dimension_numbers = #tpu.dot_dimension_numbers<[1], [0], [0], [1], [0, 0, 1, 1], [], []>} : vector<2x64xf32>, vector<64x128xf32>, vector<2x128xf32> -> vector<2x128xf32>
    %205 = vector.broadcast %7 : vector<1x128xf32> to vector<2x128xf32>
    %206 = arith.addf %204, %205 : vector<2x128xf32>
    %207 = vector.extract_strided_slice %206 {offsets = [0, 0], sizes = [2, 96], strides = [1, 1]} : vector<2x128xf32> to vector<2x96xf32>
    %cst_58 = arith.constant 5.000000e-01 : f32
    %208 = vector.broadcast %cst_58 : f32 to vector<2x96xf32>
    %209 = arith.mulf %208, %207 : vector<2x96xf32>
    %210 = math.tanh %209 : vector<2x96xf32>
    %cst_59 = arith.constant 1.000000e+00 : f32
    %211 = vector.broadcast %cst_59 : f32 to vector<2x96xf32>
    %212 = arith.addf %210, %211 : vector<2x96xf32>
    %cst_60 = arith.constant 5.000000e-01 : f32
    %213 = vector.broadcast %cst_60 : f32 to vector<2x96xf32>
    %214 = arith.mulf %213, %212 : vector<2x96xf32>
    %215 = vector.extract_strided_slice %214 {offsets = [0, 0], sizes = [2, 32], strides = [1, 1]} : vector<2x96xf32> to vector<2x32xf32>
    %216 = vector.extract_strided_slice %214 {offsets = [0, 32], sizes = [2, 32], strides = [1, 1]} : vector<2x96xf32> to vector<2x32xf32>
    %217 = vector.extract_strided_slice %214 {offsets = [0, 64], sizes = [2, 32], strides = [1, 1]} : vector<2x96xf32> to vector<2x32xf32>
    %218 = vector.extract_strided_slice %206 {offsets = [0, 96], sizes = [2, 32], strides = [1, 1]} : vector<2x128xf32> to vector<2x32xf32>
    %219 = math.tanh %218 : vector<2x32xf32>
    %220 = arith.mulf %216, %177 : vector<2x32xf32>
    %221 = arith.mulf %215, %219 : vector<2x32xf32>
    %222 = arith.addf %220, %221 : vector<2x32xf32>
    %223 = math.tanh %222 : vector<2x32xf32>
    %224 = arith.mulf %217, %223 : vector<2x32xf32>
    %225 = vector.extract_strided_slice %224 {offsets = [1, 0], sizes = [1, 32], strides = [1, 1]} : vector<2x32xf32> to vector<1x32xf32>
    %226 = tpu.concatenate %43, %202 in 1 : vector<2x32xf32>, vector<2x32xf32> -> vector<2x64xf32>
    %cst_61 = arith.constant dense<0.000000e+00> : vector<2x128xf32>
    %227 = tpu.matmul %226, %1, %cst_61 {dimension_numbers = #tpu.dot_dimension_numbers<[1], [0], [0], [1], [0, 0, 1, 1], [], []>} : vector<2x64xf32>, vector<64x128xf32>, vector<2x128xf32> -> vector<2x128xf32>
    %228 = vector.broadcast %5 : vector<1x128xf32> to vector<2x128xf32>
    %229 = arith.addf %227, %228 : vector<2x128xf32>
    %230 = vector.extract_strided_slice %229 {offsets = [0, 0], sizes = [2, 96], strides = [1, 1]} : vector<2x128xf32> to vector<2x96xf32>
    %cst_62 = arith.constant 5.000000e-01 : f32
    %231 = vector.broadcast %cst_62 : f32 to vector<2x96xf32>
    %232 = arith.mulf %231, %230 : vector<2x96xf32>
    %233 = math.tanh %232 : vector<2x96xf32>
    %cst_63 = arith.constant 1.000000e+00 : f32
    %234 = vector.broadcast %cst_63 : f32 to vector<2x96xf32>
    %235 = arith.addf %233, %234 : vector<2x96xf32>
    %cst_64 = arith.constant 5.000000e-01 : f32
    %236 = vector.broadcast %cst_64 : f32 to vector<2x96xf32>
    %237 = arith.mulf %236, %235 : vector<2x96xf32>
    %238 = vector.extract_strided_slice %237 {offsets = [0, 0], sizes = [2, 32], strides = [1, 1]} : vector<2x96xf32> to vector<2x32xf32>
    %239 = vector.extract_strided_slice %237 {offsets = [0, 32], sizes = [2, 32], strides = [1, 1]} : vector<2x96xf32> to vector<2x32xf32>
    %240 = vector.extract_strided_slice %237 {offsets = [0, 64], sizes = [2, 32], strides = [1, 1]} : vector<2x96xf32> to vector<2x32xf32>
    %241 = vector.extract_strided_slice %229 {offsets = [0, 96], sizes = [2, 32], strides = [1, 1]} : vector<2x128xf32> to vector<2x32xf32>
    %242 = math.tanh %241 : vector<2x32xf32>
    %243 = arith.mulf %239, %200 : vector<2x32xf32>
    %244 = arith.mulf %238, %242 : vector<2x32xf32>
    %245 = arith.addf %243, %244 : vector<2x32xf32>
    %246 = math.tanh %245 : vector<2x32xf32>
    %247 = arith.mulf %240, %246 : vector<2x32xf32>
    %248 = tpu.concatenate %202, %224 in 1 : vector<2x32xf32>, vector<2x32xf32> -> vector<2x64xf32>
    %cst_65 = arith.constant dense<0.000000e+00> : vector<2x128xf32>
    %249 = tpu.matmul %248, %3, %cst_65 {dimension_numbers = #tpu.dot_dimension_numbers<[1], [0], [0], [1], [0, 0, 1, 1], [], []>} : vector<2x64xf32>, vector<64x128xf32>, vector<2x128xf32> -> vector<2x128xf32>
    %250 = vector.broadcast %7 : vector<1x128xf32> to vector<2x128xf32>
    %251 = arith.addf %249, %250 : vector<2x128xf32>
    %252 = vector.extract_strided_slice %251 {offsets = [0, 0], sizes = [2, 96], strides = [1, 1]} : vector<2x128xf32> to vector<2x96xf32>
    %cst_66 = arith.constant 5.000000e-01 : f32
    %253 = vector.broadcast %cst_66 : f32 to vector<2x96xf32>
    %254 = arith.mulf %253, %252 : vector<2x96xf32>
    %255 = math.tanh %254 : vector<2x96xf32>
    %cst_67 = arith.constant 1.000000e+00 : f32
    %256 = vector.broadcast %cst_67 : f32 to vector<2x96xf32>
    %257 = arith.addf %255, %256 : vector<2x96xf32>
    %cst_68 = arith.constant 5.000000e-01 : f32
    %258 = vector.broadcast %cst_68 : f32 to vector<2x96xf32>
    %259 = arith.mulf %258, %257 : vector<2x96xf32>
    %260 = vector.extract_strided_slice %259 {offsets = [0, 0], sizes = [2, 32], strides = [1, 1]} : vector<2x96xf32> to vector<2x32xf32>
    %261 = vector.extract_strided_slice %259 {offsets = [0, 32], sizes = [2, 32], strides = [1, 1]} : vector<2x96xf32> to vector<2x32xf32>
    %262 = vector.extract_strided_slice %259 {offsets = [0, 64], sizes = [2, 32], strides = [1, 1]} : vector<2x96xf32> to vector<2x32xf32>
    %263 = vector.extract_strided_slice %251 {offsets = [0, 96], sizes = [2, 32], strides = [1, 1]} : vector<2x128xf32> to vector<2x32xf32>
    %264 = math.tanh %263 : vector<2x32xf32>
    %265 = arith.mulf %261, %222 : vector<2x32xf32>
    %266 = arith.mulf %260, %264 : vector<2x32xf32>
    %267 = arith.addf %265, %266 : vector<2x32xf32>
    %268 = math.tanh %267 : vector<2x32xf32>
    %269 = arith.mulf %262, %268 : vector<2x32xf32>
    %270 = vector.extract_strided_slice %269 {offsets = [1, 0], sizes = [1, 32], strides = [1, 1]} : vector<2x32xf32> to vector<1x32xf32>
    %271 = tpu.concatenate %50, %247 in 1 : vector<2x32xf32>, vector<2x32xf32> -> vector<2x64xf32>
    %cst_69 = arith.constant dense<0.000000e+00> : vector<2x128xf32>
    %272 = tpu.matmul %271, %1, %cst_69 {dimension_numbers = #tpu.dot_dimension_numbers<[1], [0], [0], [1], [0, 0, 1, 1], [], []>} : vector<2x64xf32>, vector<64x128xf32>, vector<2x128xf32> -> vector<2x128xf32>
    %273 = vector.broadcast %5 : vector<1x128xf32> to vector<2x128xf32>
    %274 = arith.addf %272, %273 : vector<2x128xf32>
    %275 = vector.extract_strided_slice %274 {offsets = [0, 0], sizes = [2, 96], strides = [1, 1]} : vector<2x128xf32> to vector<2x96xf32>
    %cst_70 = arith.constant 5.000000e-01 : f32
    %276 = vector.broadcast %cst_70 : f32 to vector<2x96xf32>
    %277 = arith.mulf %276, %275 : vector<2x96xf32>
    %278 = math.tanh %277 : vector<2x96xf32>
    %cst_71 = arith.constant 1.000000e+00 : f32
    %279 = vector.broadcast %cst_71 : f32 to vector<2x96xf32>
    %280 = arith.addf %278, %279 : vector<2x96xf32>
    %cst_72 = arith.constant 5.000000e-01 : f32
    %281 = vector.broadcast %cst_72 : f32 to vector<2x96xf32>
    %282 = arith.mulf %281, %280 : vector<2x96xf32>
    %283 = vector.extract_strided_slice %282 {offsets = [0, 0], sizes = [2, 32], strides = [1, 1]} : vector<2x96xf32> to vector<2x32xf32>
    %284 = vector.extract_strided_slice %282 {offsets = [0, 32], sizes = [2, 32], strides = [1, 1]} : vector<2x96xf32> to vector<2x32xf32>
    %285 = vector.extract_strided_slice %282 {offsets = [0, 64], sizes = [2, 32], strides = [1, 1]} : vector<2x96xf32> to vector<2x32xf32>
    %286 = vector.extract_strided_slice %274 {offsets = [0, 96], sizes = [2, 32], strides = [1, 1]} : vector<2x128xf32> to vector<2x32xf32>
    %287 = math.tanh %286 : vector<2x32xf32>
    %288 = arith.mulf %284, %245 : vector<2x32xf32>
    %289 = arith.mulf %283, %287 : vector<2x32xf32>
    %290 = arith.addf %288, %289 : vector<2x32xf32>
    %291 = math.tanh %290 : vector<2x32xf32>
    %292 = arith.mulf %285, %291 : vector<2x32xf32>
    %293 = tpu.concatenate %247, %269 in 1 : vector<2x32xf32>, vector<2x32xf32> -> vector<2x64xf32>
    %cst_73 = arith.constant dense<0.000000e+00> : vector<2x128xf32>
    %294 = tpu.matmul %293, %3, %cst_73 {dimension_numbers = #tpu.dot_dimension_numbers<[1], [0], [0], [1], [0, 0, 1, 1], [], []>} : vector<2x64xf32>, vector<64x128xf32>, vector<2x128xf32> -> vector<2x128xf32>
    %295 = vector.broadcast %7 : vector<1x128xf32> to vector<2x128xf32>
    %296 = arith.addf %294, %295 : vector<2x128xf32>
    %297 = vector.extract_strided_slice %296 {offsets = [0, 0], sizes = [2, 96], strides = [1, 1]} : vector<2x128xf32> to vector<2x96xf32>
    %cst_74 = arith.constant 5.000000e-01 : f32
    %298 = vector.broadcast %cst_74 : f32 to vector<2x96xf32>
    %299 = arith.mulf %298, %297 : vector<2x96xf32>
    %300 = math.tanh %299 : vector<2x96xf32>
    %cst_75 = arith.constant 1.000000e+00 : f32
    %301 = vector.broadcast %cst_75 : f32 to vector<2x96xf32>
    %302 = arith.addf %300, %301 : vector<2x96xf32>
    %cst_76 = arith.constant 5.000000e-01 : f32
    %303 = vector.broadcast %cst_76 : f32 to vector<2x96xf32>
    %304 = arith.mulf %303, %302 : vector<2x96xf32>
    %305 = vector.extract_strided_slice %304 {offsets = [0, 0], sizes = [2, 32], strides = [1, 1]} : vector<2x96xf32> to vector<2x32xf32>
    %306 = vector.extract_strided_slice %304 {offsets = [0, 32], sizes = [2, 32], strides = [1, 1]} : vector<2x96xf32> to vector<2x32xf32>
    %307 = vector.extract_strided_slice %304 {offsets = [0, 64], sizes = [2, 32], strides = [1, 1]} : vector<2x96xf32> to vector<2x32xf32>
    %308 = vector.extract_strided_slice %296 {offsets = [0, 96], sizes = [2, 32], strides = [1, 1]} : vector<2x128xf32> to vector<2x32xf32>
    %309 = math.tanh %308 : vector<2x32xf32>
    %310 = arith.mulf %306, %267 : vector<2x32xf32>
    %311 = arith.mulf %305, %309 : vector<2x32xf32>
    %312 = arith.addf %310, %311 : vector<2x32xf32>
    %313 = math.tanh %312 : vector<2x32xf32>
    %314 = arith.mulf %307, %313 : vector<2x32xf32>
    %315 = vector.extract_strided_slice %314 {offsets = [1, 0], sizes = [1, 32], strides = [1, 1]} : vector<2x32xf32> to vector<1x32xf32>
    %316 = tpu.concatenate %57, %292 in 1 : vector<2x32xf32>, vector<2x32xf32> -> vector<2x64xf32>
    %cst_77 = arith.constant dense<0.000000e+00> : vector<2x128xf32>
    %317 = tpu.matmul %316, %1, %cst_77 {dimension_numbers = #tpu.dot_dimension_numbers<[1], [0], [0], [1], [0, 0, 1, 1], [], []>} : vector<2x64xf32>, vector<64x128xf32>, vector<2x128xf32> -> vector<2x128xf32>
    %318 = vector.broadcast %5 : vector<1x128xf32> to vector<2x128xf32>
    %319 = arith.addf %317, %318 : vector<2x128xf32>
    %320 = vector.extract_strided_slice %319 {offsets = [0, 0], sizes = [2, 96], strides = [1, 1]} : vector<2x128xf32> to vector<2x96xf32>
    %cst_78 = arith.constant 5.000000e-01 : f32
    %321 = vector.broadcast %cst_78 : f32 to vector<2x96xf32>
    %322 = arith.mulf %321, %320 : vector<2x96xf32>
    %323 = math.tanh %322 : vector<2x96xf32>
    %cst_79 = arith.constant 1.000000e+00 : f32
    %324 = vector.broadcast %cst_79 : f32 to vector<2x96xf32>
    %325 = arith.addf %323, %324 : vector<2x96xf32>
    %cst_80 = arith.constant 5.000000e-01 : f32
    %326 = vector.broadcast %cst_80 : f32 to vector<2x96xf32>
    %327 = arith.mulf %326, %325 : vector<2x96xf32>
    %328 = vector.extract_strided_slice %327 {offsets = [0, 0], sizes = [2, 32], strides = [1, 1]} : vector<2x96xf32> to vector<2x32xf32>
    %329 = vector.extract_strided_slice %327 {offsets = [0, 32], sizes = [2, 32], strides = [1, 1]} : vector<2x96xf32> to vector<2x32xf32>
    %330 = vector.extract_strided_slice %327 {offsets = [0, 64], sizes = [2, 32], strides = [1, 1]} : vector<2x96xf32> to vector<2x32xf32>
    %331 = vector.extract_strided_slice %319 {offsets = [0, 96], sizes = [2, 32], strides = [1, 1]} : vector<2x128xf32> to vector<2x32xf32>
    %332 = math.tanh %331 : vector<2x32xf32>
    %333 = arith.mulf %329, %290 : vector<2x32xf32>
    %334 = arith.mulf %328, %332 : vector<2x32xf32>
    %335 = arith.addf %333, %334 : vector<2x32xf32>
    %336 = math.tanh %335 : vector<2x32xf32>
    %337 = arith.mulf %330, %336 : vector<2x32xf32>
    %338 = tpu.concatenate %292, %314 in 1 : vector<2x32xf32>, vector<2x32xf32> -> vector<2x64xf32>
    %cst_81 = arith.constant dense<0.000000e+00> : vector<2x128xf32>
    %339 = tpu.matmul %338, %3, %cst_81 {dimension_numbers = #tpu.dot_dimension_numbers<[1], [0], [0], [1], [0, 0, 1, 1], [], []>} : vector<2x64xf32>, vector<64x128xf32>, vector<2x128xf32> -> vector<2x128xf32>
    %340 = vector.broadcast %7 : vector<1x128xf32> to vector<2x128xf32>
    %341 = arith.addf %339, %340 : vector<2x128xf32>
    %342 = vector.extract_strided_slice %341 {offsets = [0, 0], sizes = [2, 96], strides = [1, 1]} : vector<2x128xf32> to vector<2x96xf32>
    %cst_82 = arith.constant 5.000000e-01 : f32
    %343 = vector.broadcast %cst_82 : f32 to vector<2x96xf32>
    %344 = arith.mulf %343, %342 : vector<2x96xf32>
    %345 = math.tanh %344 : vector<2x96xf32>
    %cst_83 = arith.constant 1.000000e+00 : f32
    %346 = vector.broadcast %cst_83 : f32 to vector<2x96xf32>
    %347 = arith.addf %345, %346 : vector<2x96xf32>
    %cst_84 = arith.constant 5.000000e-01 : f32
    %348 = vector.broadcast %cst_84 : f32 to vector<2x96xf32>
    %349 = arith.mulf %348, %347 : vector<2x96xf32>
    %350 = vector.extract_strided_slice %349 {offsets = [0, 0], sizes = [2, 32], strides = [1, 1]} : vector<2x96xf32> to vector<2x32xf32>
    %351 = vector.extract_strided_slice %349 {offsets = [0, 32], sizes = [2, 32], strides = [1, 1]} : vector<2x96xf32> to vector<2x32xf32>
    %352 = vector.extract_strided_slice %349 {offsets = [0, 64], sizes = [2, 32], strides = [1, 1]} : vector<2x96xf32> to vector<2x32xf32>
    %353 = vector.extract_strided_slice %341 {offsets = [0, 96], sizes = [2, 32], strides = [1, 1]} : vector<2x128xf32> to vector<2x32xf32>
    %354 = math.tanh %353 : vector<2x32xf32>
    %355 = arith.mulf %351, %312 : vector<2x32xf32>
    %356 = arith.mulf %350, %354 : vector<2x32xf32>
    %357 = arith.addf %355, %356 : vector<2x32xf32>
    %358 = math.tanh %357 : vector<2x32xf32>
    %359 = arith.mulf %352, %358 : vector<2x32xf32>
    %360 = vector.extract_strided_slice %359 {offsets = [1, 0], sizes = [1, 32], strides = [1, 1]} : vector<2x32xf32> to vector<1x32xf32>
    %361 = tpu.concatenate %64, %337 in 1 : vector<2x32xf32>, vector<2x32xf32> -> vector<2x64xf32>
    %cst_85 = arith.constant dense<0.000000e+00> : vector<2x128xf32>
    %362 = tpu.matmul %361, %1, %cst_85 {dimension_numbers = #tpu.dot_dimension_numbers<[1], [0], [0], [1], [0, 0, 1, 1], [], []>} : vector<2x64xf32>, vector<64x128xf32>, vector<2x128xf32> -> vector<2x128xf32>
    %363 = vector.broadcast %5 : vector<1x128xf32> to vector<2x128xf32>
    %364 = arith.addf %362, %363 : vector<2x128xf32>
    %365 = vector.extract_strided_slice %364 {offsets = [0, 0], sizes = [2, 96], strides = [1, 1]} : vector<2x128xf32> to vector<2x96xf32>
    %cst_86 = arith.constant 5.000000e-01 : f32
    %366 = vector.broadcast %cst_86 : f32 to vector<2x96xf32>
    %367 = arith.mulf %366, %365 : vector<2x96xf32>
    %368 = math.tanh %367 : vector<2x96xf32>
    %cst_87 = arith.constant 1.000000e+00 : f32
    %369 = vector.broadcast %cst_87 : f32 to vector<2x96xf32>
    %370 = arith.addf %368, %369 : vector<2x96xf32>
    %cst_88 = arith.constant 5.000000e-01 : f32
    %371 = vector.broadcast %cst_88 : f32 to vector<2x96xf32>
    %372 = arith.mulf %371, %370 : vector<2x96xf32>
    %373 = vector.extract_strided_slice %372 {offsets = [0, 0], sizes = [2, 32], strides = [1, 1]} : vector<2x96xf32> to vector<2x32xf32>
    %374 = vector.extract_strided_slice %372 {offsets = [0, 32], sizes = [2, 32], strides = [1, 1]} : vector<2x96xf32> to vector<2x32xf32>
    %375 = vector.extract_strided_slice %372 {offsets = [0, 64], sizes = [2, 32], strides = [1, 1]} : vector<2x96xf32> to vector<2x32xf32>
    %376 = vector.extract_strided_slice %364 {offsets = [0, 96], sizes = [2, 32], strides = [1, 1]} : vector<2x128xf32> to vector<2x32xf32>
    %377 = math.tanh %376 : vector<2x32xf32>
    %378 = arith.mulf %374, %335 : vector<2x32xf32>
    %379 = arith.mulf %373, %377 : vector<2x32xf32>
    %380 = arith.addf %378, %379 : vector<2x32xf32>
    %381 = math.tanh %380 : vector<2x32xf32>
    %382 = arith.mulf %375, %381 : vector<2x32xf32>
    %383 = tpu.concatenate %337, %359 in 1 : vector<2x32xf32>, vector<2x32xf32> -> vector<2x64xf32>
    %cst_89 = arith.constant dense<0.000000e+00> : vector<2x128xf32>
    %384 = tpu.matmul %383, %3, %cst_89 {dimension_numbers = #tpu.dot_dimension_numbers<[1], [0], [0], [1], [0, 0, 1, 1], [], []>} : vector<2x64xf32>, vector<64x128xf32>, vector<2x128xf32> -> vector<2x128xf32>
    %385 = vector.broadcast %7 : vector<1x128xf32> to vector<2x128xf32>
    %386 = arith.addf %384, %385 : vector<2x128xf32>
    %387 = vector.extract_strided_slice %386 {offsets = [0, 0], sizes = [2, 96], strides = [1, 1]} : vector<2x128xf32> to vector<2x96xf32>
    %cst_90 = arith.constant 5.000000e-01 : f32
    %388 = vector.broadcast %cst_90 : f32 to vector<2x96xf32>
    %389 = arith.mulf %388, %387 : vector<2x96xf32>
    %390 = math.tanh %389 : vector<2x96xf32>
    %cst_91 = arith.constant 1.000000e+00 : f32
    %391 = vector.broadcast %cst_91 : f32 to vector<2x96xf32>
    %392 = arith.addf %390, %391 : vector<2x96xf32>
    %cst_92 = arith.constant 5.000000e-01 : f32
    %393 = vector.broadcast %cst_92 : f32 to vector<2x96xf32>
    %394 = arith.mulf %393, %392 : vector<2x96xf32>
    %395 = vector.extract_strided_slice %394 {offsets = [0, 0], sizes = [2, 32], strides = [1, 1]} : vector<2x96xf32> to vector<2x32xf32>
    %396 = vector.extract_strided_slice %394 {offsets = [0, 32], sizes = [2, 32], strides = [1, 1]} : vector<2x96xf32> to vector<2x32xf32>
    %397 = vector.extract_strided_slice %394 {offsets = [0, 64], sizes = [2, 32], strides = [1, 1]} : vector<2x96xf32> to vector<2x32xf32>
    %398 = vector.extract_strided_slice %386 {offsets = [0, 96], sizes = [2, 32], strides = [1, 1]} : vector<2x128xf32> to vector<2x32xf32>
    %399 = math.tanh %398 : vector<2x32xf32>
    %400 = arith.mulf %396, %357 : vector<2x32xf32>
    %401 = arith.mulf %395, %399 : vector<2x32xf32>
    %402 = arith.addf %400, %401 : vector<2x32xf32>
    %403 = math.tanh %402 : vector<2x32xf32>
    %404 = arith.mulf %397, %403 : vector<2x32xf32>
    %405 = vector.extract_strided_slice %404 {offsets = [1, 0], sizes = [1, 32], strides = [1, 1]} : vector<2x32xf32> to vector<1x32xf32>
    %406 = tpu.concatenate %382, %404 in 1 : vector<2x32xf32>, vector<2x32xf32> -> vector<2x64xf32>
    %cst_93 = arith.constant dense<0.000000e+00> : vector<2x128xf32>
    %407 = tpu.matmul %406, %3, %cst_93 {dimension_numbers = #tpu.dot_dimension_numbers<[1], [0], [0], [1], [0, 0, 1, 1], [], []>} : vector<2x64xf32>, vector<64x128xf32>, vector<2x128xf32> -> vector<2x128xf32>
    %408 = vector.broadcast %7 : vector<1x128xf32> to vector<2x128xf32>
    %409 = arith.addf %407, %408 : vector<2x128xf32>
    %410 = vector.extract_strided_slice %409 {offsets = [0, 0], sizes = [2, 96], strides = [1, 1]} : vector<2x128xf32> to vector<2x96xf32>
    %cst_94 = arith.constant 5.000000e-01 : f32
    %411 = vector.broadcast %cst_94 : f32 to vector<2x96xf32>
    %412 = arith.mulf %411, %410 : vector<2x96xf32>
    %413 = math.tanh %412 : vector<2x96xf32>
    %cst_95 = arith.constant 1.000000e+00 : f32
    %414 = vector.broadcast %cst_95 : f32 to vector<2x96xf32>
    %415 = arith.addf %413, %414 : vector<2x96xf32>
    %cst_96 = arith.constant 5.000000e-01 : f32
    %416 = vector.broadcast %cst_96 : f32 to vector<2x96xf32>
    %417 = arith.mulf %416, %415 : vector<2x96xf32>
    %418 = vector.extract_strided_slice %417 {offsets = [0, 0], sizes = [2, 32], strides = [1, 1]} : vector<2x96xf32> to vector<2x32xf32>
    %419 = vector.extract_strided_slice %417 {offsets = [0, 32], sizes = [2, 32], strides = [1, 1]} : vector<2x96xf32> to vector<2x32xf32>
    %420 = vector.extract_strided_slice %417 {offsets = [0, 64], sizes = [2, 32], strides = [1, 1]} : vector<2x96xf32> to vector<2x32xf32>
    %421 = vector.extract_strided_slice %409 {offsets = [0, 96], sizes = [2, 32], strides = [1, 1]} : vector<2x128xf32> to vector<2x32xf32>
    %422 = math.tanh %421 : vector<2x32xf32>
    %423 = arith.mulf %419, %402 : vector<2x32xf32>
    %424 = arith.mulf %418, %422 : vector<2x32xf32>
    %425 = arith.addf %423, %424 : vector<2x32xf32>
    %426 = math.tanh %425 : vector<2x32xf32>
    %427 = arith.mulf %420, %426 : vector<2x32xf32>
    %428 = vector.extract_strided_slice %427 {offsets = [1, 0], sizes = [1, 32], strides = [1, 1]} : vector<2x32xf32> to vector<1x32xf32>
    %429 = tpu.concatenate %135, %180, %225, %270, %315, %360, %405, %428 in 0 : vector<1x32xf32>, vector<1x32xf32>, vector<1x32xf32>, vector<1x32xf32>, vector<1x32xf32>, vector<1x32xf32>, vector<1x32xf32>, vector<1x32xf32> -> vector<8x32xf32>
    %430 = vector.broadcast %8 : vector<1x32xf32> to vector<8x32xf32>
    %431 = arith.mulf %429, %430 : vector<8x32xf32>
    %cst_97 = arith.constant dense<0.000000e+00> : vector<8xf32>
    %432 = vector.multi_reduction <add>, %431, %cst_97 [1] : vector<8x32xf32> to vector<8xf32>
    %433 = vector.shape_cast %432 : vector<8xf32> to vector<8x1xf32>
    %c0_98 = arith.constant 0 : index
    %c0_99 = arith.constant 0 : index
    %434 = vector.load %arg5[%c0_98, %c0_99] : memref<1x1xf32, #tpu.memory_space<vmem>>, vector<1x1xf32>
    %435 = vector.broadcast %434 : vector<1x1xf32> to vector<8x1xf32>
    %436 = arith.addf %433, %435 : vector<8x1xf32>
    %c0_100 = arith.constant 0 : index
    %c0_101 = arith.constant 0 : index
    %437 = vector.load %arg6[%c0_100, %c0_101] : memref<8x1xf32, #tpu.memory_space<vmem>>, vector<8x1xf32>
    tpu.vector_store %arg6[%c0_100, %c0_101], %436 {strides = array<i32>} : memref<8x1xf32, #tpu.memory_space<vmem>>, vector<8x1xf32>,
    return
  }
}

</mosaic_0001>

<llo_original>
// kernel: tpu_custom_call.1
$region0: #{tpu_custom_call.1}
  #allocation0 [shape = 'u32[]', space=smem, size = 0x4, offset = 0x4, fixed_abs, tag = 'smem constant byte address 0x4 - core index']
  #allocation1 [shape = 'u32[144,128]{1,0:T(1,128)}', space=vmem, size = 0x12000, scoped, tag = 'internal scratch']
  #allocation2 [shape = 'f32[1,1]{1,0:T(1,128)S(1)}', space=vmem, size = 0x200, scoped, tag = 'scoped memory for tpu_custom_call.1']
  %s0 = inlined_call_operand.vmem [shape: s32[16], index: 0, kind: input, shape index: {}]
  %s1 = inlined_call_operand.hbm [shape: f32[16,32], index: 1, kind: input, shape index: {}]
  %s2 = inlined_call_operand.hbm [shape: f32[2,64,128], index: 2, kind: input, shape index: {}]
  %s3 = inlined_call_operand.vmem [shape: f32[2,1,128], index: 3, kind: input, shape index: {}]
  %s4 = inlined_call_operand.vmem [shape: f32[1,32], index: 4, kind: input, shape index: {}]
  %s5 = inlined_call_operand.<no memory space> [shape: f32[1,1], index: 5, kind: input, shape index: {}]
  %s6 = inlined_call_operand.vmem [shape: f32[8,1], index: 6, kind: output, shape index: {}]
  %s7 = sld [smem:[#allocation0]]
  $region46: #{tpu_custom_call.1} parent=0
    _
  %s9 = ssub.s32 1, %s7
  %s10 = scalar_select 0, %s9, %s7
  %v11 = vstv %s5
  %12 = vst [vmem:[#allocation2] sm:$0x1] %v11
  $region1: #{tpu_custom_call.1} parent=0
    #allocation3 [shape = 'u8[512]{0}', space=smem, size = 0x200, scoped, tag = 'input window, operand 0, single buffered']
    #allocation4 [shape = 's32[1]{0}', space=sflag, size = 0x4, scoped, tag = 'scoped memory for tpu_custom_call.1']
    #allocation5 [shape = 's32[1]{0}', space=sflag, size = 0x4, scoped, tag = 'scoped memory for tpu_custom_call.1']
    #allocation6 [shape = 'u8[8192]{0}', space=vmem, size = 0x2000, scoped, tag = 'input window, operand 1, single buffered']
    #allocation7 [shape = 'u8[65536]{0}', space=vmem, size = 0x10000, scoped, tag = 'input window, operand 2, single buffered']
    #allocation8 [shape = 's32[1]{0}', space=sflag, size = 0x4, scoped, tag = 'scoped memory for tpu_custom_call.1']
    %13 = vsyncpa [#allocation5], 0
    %14 = vsyncpa [#allocation4], 0
    %15 = vsyncpa [#allocation8], 0
    // Predicated region
    $region2: #{tpu_custom_call.1} parent=1 // pred_check
      _
    $region3: #{tpu_custom_call.1} parent=1 // pred_check_branch
      %17 = sbr.rel (0) target = $region5
    $region4: #{tpu_custom_call.1} parent=1 // pred_region
      %s19 = ssub.s32 16, 16
      %20 = vsyncadd [#allocation5], %s19
      %s22 = sshll.u32 %s0, 4
      %s23 = int_to_ptr.vmem [resolvable:$true] %s22
      %25 = dma.vmem_to_smem %s23, 16, [#allocation3], [#allocation5]
    $region5: #{tpu_custom_call.1} parent=1 // pred_fallthru
      _
    // Predicated region
    $region6: #{tpu_custom_call.1} parent=1 // pred_check
      _
    $region7: #{tpu_custom_call.1} parent=1 // pred_check_branch
      %27 = sbr.rel (0) target = $region9
    $region8: #{tpu_custom_call.1} parent=1 // pred_region
      %s29 = ssub.s32 256, 256
      %30 = vsyncadd [#allocation4], %s29
      %s31 = sshll.u32 [#allocation6], 4
      %s32 = int_to_ptr.vmem [resolvable:$true] %s31
      %37 = dma.hbm_to_vmem [thread:$0]  %s1, 256, %s32, [#allocation4], 128, 128, 8
    $region9: #{tpu_custom_call.1} parent=1 // pred_fallthru
      _
    // Predicated region
    $region10: #{tpu_custom_call.1} parent=1 // pred_check
      _
    $region11: #{tpu_custom_call.1} parent=1 // pred_check_branch
      %39 = sbr.rel (0) target = $region13
    $region12: #{tpu_custom_call.1} parent=1 // pred_region
      %s41 = ssub.s32 2048, 2048
      %42 = vsyncadd [#allocation8], %s41
      %s43 = sshll.u32 [#allocation7], 4
      %s44 = int_to_ptr.vmem [resolvable:$true] %s43
      %49 = dma.hbm_to_vmem [thread:$0]  %s2, 2048, %s44, [#allocation8], 128, 128, 8
    $region13: #{tpu_custom_call.1} parent=1 // pred_fallthru
      _
    // Predicated region
    $region14: #{tpu_custom_call.1} parent=1 // pred_check
      _
    $region15: #{tpu_custom_call.1} parent=1 // pred_check_branch
      %51 = sbr.rel (0) target = $region17
    $region16: #{tpu_custom_call.1} parent=1 // pred_region
      _
    $region17: #{tpu_custom_call.1} parent=1 // pred_fallthru
      _
    // Predicated region
    $region18: #{tpu_custom_call.1} parent=1 // pred_check
      _
    $region19: #{tpu_custom_call.1} parent=1 // pred_check_branch
      %53 = sbr.rel (0) target = $region21
    $region20: #{tpu_custom_call.1} parent=1 // pred_region
      _
    $region21: #{tpu_custom_call.1} parent=1 // pred_fallthru
      _
    // Predicated region
    $region22: #{tpu_custom_call.1} parent=1 // pred_check
      _
    $region23: #{tpu_custom_call.1} parent=1 // pred_check_branch
      %55 = sbr.rel (0) target = $region25
    $region24: #{tpu_custom_call.1} parent=1 // pred_region
      _
    $region25: #{tpu_custom_call.1} parent=1 // pred_fallthru
      _
    // Predicated region
    $region26: #{tpu_custom_call.1} parent=1 // pred_check
      _
    $region27: #{tpu_custom_call.1} parent=1 // pred_check_branch
      %57 = sbr.rel (0) target = $region29
    $region28: #{tpu_custom_call.1} parent=1 // pred_region
      %58 = dma.done [#allocation5], 16
    $region29: #{tpu_custom_call.1} parent=1 // pred_fallthru
      _
    // Predicated region
    $region30: #{tpu_custom_call.1} parent=1 // pred_check
      _
    $region31: #{tpu_custom_call.1} parent=1 // pred_check_branch
      %60 = sbr.rel (0) target = $region33
    $region32: #{tpu_custom_call.1} parent=1 // pred_region
      %61 = dma.done [#allocation4], 256
    $region33: #{tpu_custom_call.1} parent=1 // pred_fallthru
      _
    // Predicated region
    $region34: #{tpu_custom_call.1} parent=1 // pred_check
      _
    $region35: #{tpu_custom_call.1} parent=1 // pred_check_branch
      %63 = sbr.rel (0) target = $region37
    $region36: #{tpu_custom_call.1} parent=1 // pred_region
      %64 = dma.done [#allocation8], 2048
    $region37: #{tpu_custom_call.1} parent=1 // pred_fallthru
      _
    %65 = sfence
    %v66 = vld [vmem:[#allocation7] sm:$0xff]
    %v67 = vld [vmem:[#allocation7 + $0x8] sm:$0xff]
    %v68 = vld [vmem:[#allocation7 + $0x10] sm:$0xff]
    %v69 = vld [vmem:[#allocation7 + $0x18] sm:$0xff]
    %v70 = vld [vmem:[#allocation7 + $0x20] sm:$0xff]
    %v71 = vld [vmem:[#allocation7 + $0x28] sm:$0xff]
    %v72 = vld [vmem:[#allocation7 + $0x30] sm:$0xff]
    %v73 = vld [vmem:[#allocation7 + $0x38] sm:$0xff]
    %s74 = scalar_lea.vmem [#allocation7], 64
    %v75 = vld [vmem:[%s74] sm:$0xff]
    %v76 = vld [vmem:[%s74 + $0x8] sm:$0xff]
    %v77 = vld [vmem:[%s74 + $0x10] sm:$0xff]
    %v78 = vld [vmem:[%s74 + $0x18] sm:$0xff]
    %v79 = vld [vmem:[%s74 + $0x20] sm:$0xff]
    %v80 = vld [vmem:[%s74 + $0x28] sm:$0xff]
    %v81 = vld [vmem:[%s74 + $0x30] sm:$0xff]
    %v82 = vld [vmem:[%s74 + $0x38] sm:$0xff]
    %v83 = vld [vmem:[%s3] sm:$0x1]
    %s84 = scalar_lea.vmem %s3, 1
    %v85 = vld [vmem:[%s84] sm:$0x1]
    %v86 = vld [vmem:[%s4] sm:$0x1]
    %s87 = sld [smem:[#allocation3]]
    %s88 = scalar_lea.vmem [#allocation6], %s87
    %v89 = vld [vmem:[%s88] sm:$0x1]
    %s90 = sld [smem:[#allocation3 + $0x1]]
    %s91 = scalar_lea.vmem [#allocation6], %s90
    %v92 = vld [vmem:[%s91] sm:$0x1]
    %v94 = vrot.slane %v92, 7
    %vm96 = vcmask 1040384
    %v97 = vsel %vm96, %v89, %v94
    %s98 = sld [smem:[#allocation3 + $0x2]]
    %s99 = scalar_lea.vmem [#allocation6], %s98
    %v100 = vld [vmem:[%s99] sm:$0x1]
    %s101 = sld [smem:[#allocation3 + $0x3]]
    %s102 = scalar_lea.vmem [#allocation6], %s101
    %v103 = vld [vmem:[%s102] sm:$0x1]
    %v105 = vrot.slane %v103, 7
    %v107 = vsel %vm96, %v100, %v105
    %s108 = sld [smem:[#allocation3 + $0x4]]
    %s109 = scalar_lea.vmem [#allocation6], %s108
    %v110 = vld [vmem:[%s109] sm:$0x1]
    %s111 = sld [smem:[#allocation3 + $0x5]]
    %s112 = scalar_lea.vmem [#allocation6], %s111
    %v113 = vld [vmem:[%s112] sm:$0x1]
    %v115 = vrot.slane %v113, 7
    %v117 = vsel %vm96, %v110, %v115
    %s118 = sld [smem:[#allocation3 + $0x6]]
    %s119 = scalar_lea.vmem [#allocation6], %s118
    %v120 = vld [vmem:[%s119] sm:$0x1]
    %s121 = sld [smem:[#allocation3 + $0x7]]
    %s122 = scalar_lea.vmem [#allocation6], %s121
    %v123 = vld [vmem:[%s122] sm:$0x1]
    %v125 = vrot.slane %v123, 7
    %v127 = vsel %vm96, %v120, %v125
    %s128 = sld [smem:[#allocation3 + $0x8]]
    %s129 = scalar_lea.vmem [#allocation6], %s128
    %v130 = vld [vmem:[%s129] sm:$0x1]
    %s131 = sld [smem:[#allocation3 + $0x9]]
    %s132 = scalar_lea.vmem [#allocation6], %s131
    %v133 = vld [vmem:[%s132] sm:$0x1]
    %v135 = vrot.slane %v133, 7
    %v137 = vsel %vm96, %v130, %v135
    %s138 = sld [smem:[#allocation3 + $0xa]]
    %s139 = scalar_lea.vmem [#allocation6], %s138
    %v140 = vld [vmem:[%s139] sm:$0x1]
    %s141 = sld [smem:[#allocation3 + $0xb]]
    %s142 = scalar_lea.vmem [#allocation6], %s141
    %v143 = vld [vmem:[%s142] sm:$0x1]
    %v145 = vrot.slane %v143, 7
    %v147 = vsel %vm96, %v140, %v145
    %s148 = sld [smem:[#allocation3 + $0xc]]
    %s149 = scalar_lea.vmem [#allocation6], %s148
    %v150 = vld [vmem:[%s149] sm:$0x1]
    %s151 = sld [smem:[#allocation3 + $0xd]]
    %s152 = scalar_lea.vmem [#allocation6], %s151
    %v153 = vld [vmem:[%s152] sm:$0x1]
    %v155 = vrot.slane %v153, 7
    %v157 = vsel %vm96, %v150, %v155
    %s158 = sld [smem:[#allocation3 + $0xe]]
    %s159 = scalar_lea.vmem [#allocation6], %s158
    %v160 = vld [vmem:[%s159] sm:$0x1]
    %s161 = sld [smem:[#allocation3 + $0xf]]
    %s162 = scalar_lea.vmem [#allocation6], %s161
    %v163 = vld [vmem:[%s162] sm:$0x1]
    %v165 = vrot.slane %v163, 7
    %v167 = vsel %vm96, %v160, %v165
    %vm168 = vcmask 261120
    %v169 = vsel %vm168, %v97, 0.0
    %v171 = vlaneseq
    %v172 = vshrl.u32 %v171, 7
    %v173 = vsub.s32 0, %v172
    %v174 = vrot.slane %v83, %v173
    %vm176 = vcmask 523264
    %v178 = vsel %vm176, %v169, 0
    %180 = vmatprep.subr.mxu0 0.0
    %181 = vmatpush1.msra.mxu0 0.0
    %182 = vmatprep.subr.mxu0 0.0
    %183 = vmatpush1.msra.mxu0 0.0
    %184 = vmatprep.subr.mxu0 0.0
    %185 = vmatpush1.msra.mxu0 0.0
    %186 = vmatprep.subr.mxu0 0.0
    %187 = vmatpush1.msra.mxu0 0.0
    %188 = vmatprep.subr.mxu0 0.0
    %189 = vmatpush1.msra.mxu0 0.0
    %190 = vmatprep.subr.mxu0 0.0
    %191 = vmatpush1.msra.mxu0 0.0
    %192 = vmatprep.subr.mxu0 0.0
    %193 = vmatpush1.msra.mxu0 0.0
    %194 = vmatprep.subr.mxu0 0.0
    %195 = vmatpush1.msra.mxu0 0.0
    %196 = vmatprep.subr.mxu0 0.0
    %197 = vmatpush1.msra.mxu0 %v73
    %198 = vmatprep.subr.mxu0 0.0
    %199 = vmatpush1.msra.mxu0 %v72
    %200 = vmatprep.subr.mxu0 0.0
    %201 = vmatpush1.msra.mxu0 %v71
    %202 = vmatprep.subr.mxu0 0.0
    %203 = vmatpush1.msra.mxu0 %v70
    %204 = vmatprep.subr.mxu0 0.0
    %205 = vmatpush1.msra.mxu0 %v69
    %206 = vmatprep.subr.mxu0 0.0
    %207 = vmatpush1.msra.mxu0 %v68
    %208 = vmatprep.subr.mxu0 0.0
    %209 = vmatpush1.msra.mxu0 %v67
    %210 = vmatprep.subr.mxu0 0.0
    %211 = vmatpush1.msra.mxu0 %v66
    %212 = vmatprep.subr.mxu0 0.0
    %213 = vmatpush2.msra.mxu0 0.0
    %214 = vmatprep.subr.mxu0 0.0
    %215 = vmatpush2.msra.mxu0 0.0
    %216 = vmatprep.subr.mxu0 0.0
    %217 = vmatpush2.msra.mxu0 0.0
    %218 = vmatprep.subr.mxu0 0.0
    %219 = vmatpush2.msra.mxu0 0.0
    %220 = vmatprep.subr.mxu0 0.0
    %221 = vmatpush2.msra.mxu0 0.0
    %222 = vmatprep.subr.mxu0 0.0
    %223 = vmatpush2.msra.mxu0 0.0
    %224 = vmatprep.subr.mxu0 0.0
    %225 = vmatpush2.msra.mxu0 0.0
    %226 = vmatprep.subr.mxu0 0.0
    %227 = vmatpush2.msra.mxu0 0.0
    %228 = vmatprep.subr.mxu0 0.0
    %229 = vmatpush2.msra.mxu0 0.0
    %230 = vmatprep.subr.mxu0 0.0
    %231 = vmatpush2.msra.mxu0 0.0
    %232 = vmatprep.subr.mxu0 0.0
    %233 = vmatpush2.msra.mxu0 0.0
    %234 = vmatprep.subr.mxu0 0.0
    %235 = vmatpush2.msra.mxu0 0.0
    %236 = vmatprep.subr.mxu0 0.0
    %237 = vmatpush2.msra.mxu0 0.0
    %238 = vmatprep.subr.mxu0 0.0
    %239 = vmatpush2.msra.mxu0 0.0
    %240 = vmatprep.subr.mxu0 0.0
    %241 = vmatpush2.msra.mxu0 0.0
    %242 = vmatprep.subr.mxu0 0.0
    %243 = vmatpush2.msra.mxu0 0.0
    %244 = vmatprep.mubr.f32.mxu0 0.0
    %245 = vmatmul.mubr.f32.gmra.mxu0 %v178
    %v246 = vpop.f32.mrf.mxu0
    %v247 = vadd.f32 %v174, %v246
    %v248 = vpop.f32.mrf.mxu0
    %249 = vdwg.mxu0
    %v250 = vmul.f32 %v247, 0.5
    %v251 = vtanh.pop %v250
    %v252 = vadd.f32 %v251, 1.0
    %v253 = vmul.f32 %v252, 0.5
    %v254 = vtanh.pop %v247
    %v255 = vmul.f32 %v253, 0.0
    %257 = vrot.lane.b32.xlu0 %v254, 32
    %v258 = vpop.permute.xlu0 %257
    %v260 = vmul.f32 %v253, %v258
    %262 = vrot.lane.b32.xlu0 %v260, 32
    %v263 = vpop.permute.xlu0 %262
    %v265 = vadd.f32 %v255, %v263
    %v266 = vtanh.pop %v265
    %268 = vrot.lane.b32.xlu0 %v266, 32
    %v269 = vpop.permute.xlu0 %268
    %v271 = vmul.f32 %v253, %v269
    %273 = vrot.lane.b32.xlu0 %v271, 96
    %v274 = vpop.permute.xlu0 %273
    %v276 = vsel %vm168, %v107, %v274
    %v278 = vsel %vm176, %v276, 0
    %280 = vmatprep.subr.mxu0 0.0
    %281 = vmatpush1.msra.mxu0 0.0
    %282 = vmatprep.subr.mxu0 0.0
    %283 = vmatpush1.msra.mxu0 0.0
    %284 = vmatprep.subr.mxu0 0.0
    %285 = vmatpush1.msra.mxu0 0.0
    %286 = vmatprep.subr.mxu0 0.0
    %287 = vmatpush1.msra.mxu0 0.0
    %288 = vmatprep.subr.mxu0 0.0
    %289 = vmatpush1.msra.mxu0 0.0
    %290 = vmatprep.subr.mxu0 0.0
    %291 = vmatpush1.msra.mxu0 0.0
    %292 = vmatprep.subr.mxu0 0.0
    %293 = vmatpush1.msra.mxu0 0.0
    %294 = vmatprep.subr.mxu0 0.0
    %295 = vmatpush1.msra.mxu0 0.0
    %296 = vmatprep.subr.mxu0 0.0
    %297 = vmatpush1.msra.mxu0 %v73
    %298 = vmatprep.subr.mxu0 0.0
    %299 = vmatpush1.msra.mxu0 %v72
    %300 = vmatprep.subr.mxu0 0.0
    %301 = vmatpush1.msra.mxu0 %v71
    %302 = vmatprep.subr.mxu0 0.0
    %303 = vmatpush1.msra.mxu0 %v70
    %304 = vmatprep.subr.mxu0 0.0
    %305 = vmatpush1.msra.mxu0 %v69
    %306 = vmatprep.subr.mxu0 0.0
    %307 = vmatpush1.msra.mxu0 %v68
    %308 = vmatprep.subr.mxu0 0.0
    %309 = vmatpush1.msra.mxu0 %v67
    %310 = vmatprep.subr.mxu0 0.0
    %311 = vmatpush1.msra.mxu0 %v66
    %312 = vmatprep.subr.mxu0 0.0
    %313 = vmatpush2.msra.mxu0 0.0
    %314 = vmatprep.subr.mxu0 0.0
    %315 = vmatpush2.msra.mxu0 0.0
    %316 = vmatprep.subr.mxu0 0.0
    %317 = vmatpush2.msra.mxu0 0.0
    %318 = vmatprep.subr.mxu0 0.0
    %319 = vmatpush2.msra.mxu0 0.0
    %320 = vmatprep.subr.mxu0 0.0
    %321 = vmatpush2.msra.mxu0 0.0
    %322 = vmatprep.subr.mxu0 0.0
    %323 = vmatpush2.msra.mxu0 0.0
    %324 = vmatprep.subr.mxu0 0.0
    %325 = vmatpush2.msra.mxu0 0.0
    %326 = vmatprep.subr.mxu0 0.0
    %327 = vmatpush2.msra.mxu0 0.0
    %328 = vmatprep.subr.mxu0 0.0
    %329 = vmatpush2.msra.mxu0 0.0
    %330 = vmatprep.subr.mxu0 0.0
    %331 = vmatpush2.msra.mxu0 0.0
    %332 = vmatprep.subr.mxu0 0.0
    %333 = vmatpush2.msra.mxu0 0.0
    %334 = vmatprep.subr.mxu0 0.0
    %335 = vmatpush2.msra.mxu0 0.0
    %336 = vmatprep.subr.mxu0 0.0
    %337 = vmatpush2.msra.mxu0 0.0
    %338 = vmatprep.subr.mxu0 0.0
    %339 = vmatpush2.msra.mxu0 0.0
    %340 = vmatprep.subr.mxu0 0.0
    %341 = vmatpush2.msra.mxu0 0.0
    %342 = vmatprep.subr.mxu0 0.0
    %343 = vmatpush2.msra.mxu0 0.0
    %344 = vmatprep.mubr.f32.mxu0 0.0
    %345 = vmatmul.mubr.f32.gmra.mxu0 %v278
    %v346 = vpop.f32.mrf.mxu0
    %v347 = vadd.f32 %v174, %v346
    %v348 = vpop.f32.mrf.mxu0
    %349 = vdwg.mxu0
    %v350 = vmul.f32 %v347, 0.5
    %v351 = vtanh.pop %v350
    %v352 = vadd.f32 %v351, 1.0
    %v353 = vmul.f32 %v352, 0.5
    %v354 = vtanh.pop %v347
    %v355 = vmul.f32 %v353, %v265
    %357 = vrot.lane.b32.xlu0 %v354, 32
    %v358 = vpop.permute.xlu0 %357
    %v360 = vmul.f32 %v353, %v358
    %362 = vrot.lane.b32.xlu0 %v360, 32
    %v363 = vpop.permute.xlu0 %362
    %v365 = vadd.f32 %v355, %v363
    %v366 = vtanh.pop %v365
    %368 = vrot.lane.b32.xlu0 %v366, 32
    %v369 = vpop.permute.xlu0 %368
    %v371 = vmul.f32 %v353, %v369
    %372 = vrot.lane.b32.xlu0 %v271, 64
    %v373 = vpop.permute.xlu0 %372
    %v375 = vsel %vm168, %v373, 0.0
    %v377 = vlaneseq
    %v378 = vshrl.u32 %v377, 7
    %v379 = vsub.s32 0, %v378
    %v380 = vrot.slane %v85, %v379
    %v383 = vsel %vm176, %v375, 0
    %385 = vmatprep.subr.mxu0 0.0
    %386 = vmatpush1.msra.mxu0 0.0
    %387 = vmatprep.subr.mxu0 0.0
    %388 = vmatpush1.msra.mxu0 0.0
    %389 = vmatprep.subr.mxu0 0.0
    %390 = vmatpush1.msra.mxu0 0.0
    %391 = vmatprep.subr.mxu0 0.0
    %392 = vmatpush1.msra.mxu0 0.0
    %393 = vmatprep.subr.mxu0 0.0
    %394 = vmatpush1.msra.mxu0 0.0
    %395 = vmatprep.subr.mxu0 0.0
    %396 = vmatpush1.msra.mxu0 0.0
    %397 = vmatprep.subr.mxu0 0.0
    %398 = vmatpush1.msra.mxu0 0.0
    %399 = vmatprep.subr.mxu0 0.0
    %400 = vmatpush1.msra.mxu0 0.0
    %401 = vmatprep.subr.mxu0 0.0
    %402 = vmatpush1.msra.mxu0 %v82
    %403 = vmatprep.subr.mxu0 0.0
    %404 = vmatpush1.msra.mxu0 %v81
    %405 = vmatprep.subr.mxu0 0.0
    %406 = vmatpush1.msra.mxu0 %v80
    %407 = vmatprep.subr.mxu0 0.0
    %408 = vmatpush1.msra.mxu0 %v79
    %409 = vmatprep.subr.mxu0 0.0
    %410 = vmatpush1.msra.mxu0 %v78
    %411 = vmatprep.subr.mxu0 0.0
    %412 = vmatpush1.msra.mxu0 %v77
    %413 = vmatprep.subr.mxu0 0.0
    %414 = vmatpush1.msra.mxu0 %v76
    %415 = vmatprep.subr.mxu0 0.0
    %416 = vmatpush1.msra.mxu0 %v75
    %417 = vmatprep.subr.mxu0 0.0
    %418 = vmatpush2.msra.mxu0 0.0
    %419 = vmatprep.subr.mxu0 0.0
    %420 = vmatpush2.msra.mxu0 0.0
    %421 = vmatprep.subr.mxu0 0.0
    %422 = vmatpush2.msra.mxu0 0.0
    %423 = vmatprep.subr.mxu0 0.0
    %424 = vmatpush2.msra.mxu0 0.0
    %425 = vmatprep.subr.mxu0 0.0
    %426 = vmatpush2.msra.mxu0 0.0
    %427 = vmatprep.subr.mxu0 0.0
    %428 = vmatpush2.msra.mxu0 0.0
    %429 = vmatprep.subr.mxu0 0.0
    %430 = vmatpush2.msra.mxu0 0.0
    %431 = vmatprep.subr.mxu0 0.0
    %432 = vmatpush2.msra.mxu0 0.0
    %433 = vmatprep.subr.mxu0 0.0
    %434 = vmatpush2.msra.mxu0 0.0
    %435 = vmatprep.subr.mxu0 0.0
    %436 = vmatpush2.msra.mxu0 0.0
    %437 = vmatprep.subr.mxu0 0.0
    %438 = vmatpush2.msra.mxu0 0.0
    %439 = vmatprep.subr.mxu0 0.0
    %440 = vmatpush2.msra.mxu0 0.0
    %441 = vmatprep.subr.mxu0 0.0
    %442 = vmatpush2.msra.mxu0 0.0
    %443 = vmatprep.subr.mxu0 0.0
    %444 = vmatpush2.msra.mxu0 0.0
    %445 = vmatprep.subr.mxu0 0.0
    %446 = vmatpush2.msra.mxu0 0.0
    %447 = vmatprep.subr.mxu0 0.0
    %448 = vmatpush2.msra.mxu0 0.0
    %449 = vmatprep.mubr.f32.mxu0 0.0
    %450 = vmatmul.mubr.f32.gmra.mxu0 %v383
    %v451 = vpop.f32.mrf.mxu0
    %v452 = vadd.f32 %v380, %v451
    %v453 = vpop.f32.mrf.mxu0
    %454 = vdwg.mxu0
    %v455 = vmul.f32 %v452, 0.5
    %v456 = vtanh.pop %v455
    %v457 = vadd.f32 %v456, 1.0
    %v458 = vmul.f32 %v457, 0.5
    %v459 = vtanh.pop %v452
    %v460 = vmul.f32 %v458, 0.0
    %462 = vrot.lane.b32.xlu0 %v459, 32
    %v463 = vpop.permute.xlu0 %462
    %v465 = vmul.f32 %v458, %v463
    %467 = vrot.lane.b32.xlu0 %v465, 32
    %v468 = vpop.permute.xlu0 %467
    %v470 = vadd.f32 %v460, %v468
    %v471 = vtanh.pop %v470
    %473 = vrot.lane.b32.xlu0 %v471, 32
    %v474 = vpop.permute.xlu0 %473
    %v476 = vmul.f32 %v458, %v474
    %478 = vrot.lane.b32.xlu0 %v371, 96
    %v479 = vpop.permute.xlu0 %478
    %v481 = vsel %vm168, %v117, %v479
    %v483 = vsel %vm176, %v481, 0
    %485 = vmatprep.subr.mxu0 0.0
    %486 = vmatpush1.msra.mxu0 0.0
    %487 = vmatprep.subr.mxu0 0.0
    %488 = vmatpush1.msra.mxu0 0.0
    %489 = vmatprep.subr.mxu0 0.0
    %490 = vmatpush1.msra.mxu0 0.0
    %491 = vmatprep.subr.mxu0 0.0
    %492 = vmatpush1.msra.mxu0 0.0
    %493 = vmatprep.subr.mxu0 0.0
    %494 = vmatpush1.msra.mxu0 0.0
    %495 = vmatprep.subr.mxu0 0.0
    %496 = vmatpush1.msra.mxu0 0.0
    %497 = vmatprep.subr.mxu0 0.0
    %498 = vmatpush1.msra.mxu0 0.0
    %499 = vmatprep.subr.mxu0 0.0
    %500 = vmatpush1.msra.mxu0 0.0
    %501 = vmatprep.subr.mxu0 0.0
    %502 = vmatpush1.msra.mxu0 %v73
    %503 = vmatprep.subr.mxu0 0.0
    %504 = vmatpush1.msra.mxu0 %v72
    %505 = vmatprep.subr.mxu0 0.0
    %506 = vmatpush1.msra.mxu0 %v71
    %507 = vmatprep.subr.mxu0 0.0
    %508 = vmatpush1.msra.mxu0 %v70
    %509 = vmatprep.subr.mxu0 0.0
    %510 = vmatpush1.msra.mxu0 %v69
    %511 = vmatprep.subr.mxu0 0.0
    %512 = vmatpush1.msra.mxu0 %v68
    %513 = vmatprep.subr.mxu0 0.0
    %514 = vmatpush1.msra.mxu0 %v67
    %515 = vmatprep.subr.mxu0 0.0
    %516 = vmatpush1.msra.mxu0 %v66
    %517 = vmatprep.subr.mxu0 0.0
    %518 = vmatpush2.msra.mxu0 0.0
    %519 = vmatprep.subr.mxu0 0.0
    %520 = vmatpush2.msra.mxu0 0.0
    %521 = vmatprep.subr.mxu0 0.0
    %522 = vmatpush2.msra.mxu0 0.0
    %523 = vmatprep.subr.mxu0 0.0
    %524 = vmatpush2.msra.mxu0 0.0
    %525 = vmatprep.subr.mxu0 0.0
    %526 = vmatpush2.msra.mxu0 0.0
    %527 = vmatprep.subr.mxu0 0.0
    %528 = vmatpush2.msra.mxu0 0.0
    %529 = vmatprep.subr.mxu0 0.0
    %530 = vmatpush2.msra.mxu0 0.0
    %531 = vmatprep.subr.mxu0 0.0
    %532 = vmatpush2.msra.mxu0 0.0
    %533 = vmatprep.subr.mxu0 0.0
    %534 = vmatpush2.msra.mxu0 0.0
    %535 = vmatprep.subr.mxu0 0.0
    %536 = vmatpush2.msra.mxu0 0.0
    %537 = vmatprep.subr.mxu0 0.0
    %538 = vmatpush2.msra.mxu0 0.0
    %539 = vmatprep.subr.mxu0 0.0
    %540 = vmatpush2.msra.mxu0 0.0
    %541 = vmatprep.subr.mxu0 0.0
    %542 = vmatpush2.msra.mxu0 0.0
    %543 = vmatprep.subr.mxu0 0.0
    %544 = vmatpush2.msra.mxu0 0.0
    %545 = vmatprep.subr.mxu0 0.0
    %546 = vmatpush2.msra.mxu0 0.0
    %547 = vmatprep.subr.mxu0 0.0
    %548 = vmatpush2.msra.mxu0 0.0
    %549 = vmatprep.mubr.f32.mxu0 0.0
    %550 = vmatmul.mubr.f32.gmra.mxu0 %v483
    %v551 = vpop.f32.mrf.mxu0
    %v552 = vadd.f32 %v174, %v551
    %v553 = vpop.f32.mrf.mxu0
    %554 = vdwg.mxu0
    %v555 = vmul.f32 %v552, 0.5
    %v556 = vtanh.pop %v555
    %v557 = vadd.f32 %v556, 1.0
    %v558 = vmul.f32 %v557, 0.5
    %v559 = vtanh.pop %v552
    %v560 = vmul.f32 %v558, %v365
    %562 = vrot.lane.b32.xlu0 %v559, 32
    %v563 = vpop.permute.xlu0 %562
    %v565 = vmul.f32 %v558, %v563
    %567 = vrot.lane.b32.xlu0 %v565, 32
    %v568 = vpop.permute.xlu0 %567
    %v570 = vadd.f32 %v560, %v568
    %v571 = vtanh.pop %v570
    %573 = vrot.lane.b32.xlu0 %v571, 32
    %v574 = vpop.permute.xlu0 %573
    %v576 = vmul.f32 %v558, %v574
    %577 = vrot.lane.b32.xlu0 %v371, 64
    %v578 = vpop.permute.xlu0 %577
    %581 = vrot.lane.b32.xlu0 %v476, 96
    %v582 = vpop.permute.xlu0 %581
    %v584 = vsel %vm168, %v578, %v582
    %v586 = vsel %vm176, %v584, 0
    %588 = vmatprep.subr.mxu0 0.0
    %589 = vmatpush1.msra.mxu0 0.0
    %590 = vmatprep.subr.mxu0 0.0
    %591 = vmatpush1.msra.mxu0 0.0
    %592 = vmatprep.subr.mxu0 0.0
    %593 = vmatpush1.msra.mxu0 0.0
    %594 = vmatprep.subr.mxu0 0.0
    %595 = vmatpush1.msra.mxu0 0.0
    %596 = vmatprep.subr.mxu0 0.0
    %597 = vmatpush1.msra.mxu0 0.0
    %598 = vmatprep.subr.mxu0 0.0
    %599 = vmatpush1.msra.mxu0 0.0
    %600 = vmatprep.subr.mxu0 0.0
    %601 = vmatpush1.msra.mxu0 0.0
    %602 = vmatprep.subr.mxu0 0.0
    %603 = vmatpush1.msra.mxu0 0.0
    %604 = vmatprep.subr.mxu0 0.0
    %605 = vmatpush1.msra.mxu0 %v82
    %606 = vmatprep.subr.mxu0 0.0
    %607 = vmatpush1.msra.mxu0 %v81
    %608 = vmatprep.subr.mxu0 0.0
    %609 = vmatpush1.msra.mxu0 %v80
    %610 = vmatprep.subr.mxu0 0.0
    %611 = vmatpush1.msra.mxu0 %v79
    %612 = vmatprep.subr.mxu0 0.0
    %613 = vmatpush1.msra.mxu0 %v78
    %614 = vmatprep.subr.mxu0 0.0
    %615 = vmatpush1.msra.mxu0 %v77
    %616 = vmatprep.subr.mxu0 0.0
    %617 = vmatpush1.msra.mxu0 %v76
    %618 = vmatprep.subr.mxu0 0.0
    %619 = vmatpush1.msra.mxu0 %v75
    %620 = vmatprep.subr.mxu0 0.0
    %621 = vmatpush2.msra.mxu0 0.0
    %622 = vmatprep.subr.mxu0 0.0
    %623 = vmatpush2.msra.mxu0 0.0
    %624 = vmatprep.subr.mxu0 0.0
    %625 = vmatpush2.msra.mxu0 0.0
    %626 = vmatprep.subr.mxu0 0.0
    %627 = vmatpush2.msra.mxu0 0.0
    %628 = vmatprep.subr.mxu0 0.0
    %629 = vmatpush2.msra.mxu0 0.0
    %630 = vmatprep.subr.mxu0 0.0
    %631 = vmatpush2.msra.mxu0 0.0
    %632 = vmatprep.subr.mxu0 0.0
    %633 = vmatpush2.msra.mxu0 0.0
    %634 = vmatprep.subr.mxu0 0.0
    %635 = vmatpush2.msra.mxu0 0.0
    %636 = vmatprep.subr.mxu0 0.0
    %637 = vmatpush2.msra.mxu0 0.0
    %638 = vmatprep.subr.mxu0 0.0
    %639 = vmatpush2.msra.mxu0 0.0
    %640 = vmatprep.subr.mxu0 0.0
    %641 = vmatpush2.msra.mxu0 0.0
    %642 = vmatprep.subr.mxu0 0.0
    %643 = vmatpush2.msra.mxu0 0.0
    %644 = vmatprep.subr.mxu0 0.0
    %645 = vmatpush2.msra.mxu0 0.0
    %646 = vmatprep.subr.mxu0 0.0
    %647 = vmatpush2.msra.mxu0 0.0
    %648 = vmatprep.subr.mxu0 0.0
    %649 = vmatpush2.msra.mxu0 0.0
    %650 = vmatprep.subr.mxu0 0.0
    %651 = vmatpush2.msra.mxu0 0.0
    %652 = vmatprep.mubr.f32.mxu0 0.0
    %653 = vmatmul.mubr.f32.gmra.mxu0 %v586
    %v654 = vpop.f32.mrf.mxu0
    %v655 = vadd.f32 %v380, %v654
    %v656 = vpop.f32.mrf.mxu0
    %657 = vdwg.mxu0
    %v658 = vmul.f32 %v655, 0.5
    %v659 = vtanh.pop %v658
    %v660 = vadd.f32 %v659, 1.0
    %v661 = vmul.f32 %v660, 0.5
    %v662 = vtanh.pop %v655
    %v663 = vmul.f32 %v661, %v470
    %665 = vrot.lane.b32.xlu0 %v662, 32
    %v666 = vpop.permute.xlu0 %665
    %v668 = vmul.f32 %v661, %v666
    %670 = vrot.lane.b32.xlu0 %v668, 32
    %v671 = vpop.permute.xlu0 %670
    %v673 = vadd.f32 %v663, %v671
    %v674 = vtanh.pop %v673
    %676 = vrot.lane.b32.xlu0 %v674, 32
    %v677 = vpop.permute.xlu0 %676
    %v679 = vmul.f32 %v661, %v677
    %681 = vrot.lane.b32.xlu0 %v576, 96
    %v682 = vpop.permute.xlu0 %681
    %v684 = vsel %vm168, %v127, %v682
    %v686 = vsel %vm176, %v684, 0
    %688 = vmatprep.subr.mxu0 0.0
    %689 = vmatpush1.msra.mxu0 0.0
    %690 = vmatprep.subr.mxu0 0.0
    %691 = vmatpush1.msra.mxu0 0.0
    %692 = vmatprep.subr.mxu0 0.0
    %693 = vmatpush1.msra.mxu0 0.0
    %694 = vmatprep.subr.mxu0 0.0
    %695 = vmatpush1.msra.mxu0 0.0
    %696 = vmatprep.subr.mxu0 0.0
    %697 = vmatpush1.msra.mxu0 0.0
    %698 = vmatprep.subr.mxu0 0.0
    %699 = vmatpush1.msra.mxu0 0.0
    %700 = vmatprep.subr.mxu0 0.0
    %701 = vmatpush1.msra.mxu0 0.0
    %702 = vmatprep.subr.mxu0 0.0
    %703 = vmatpush1.msra.mxu0 0.0
    %704 = vmatprep.subr.mxu0 0.0
    %705 = vmatpush1.msra.mxu0 %v73
    %706 = vmatprep.subr.mxu0 0.0
    %707 = vmatpush1.msra.mxu0 %v72
    %708 = vmatprep.subr.mxu0 0.0
    %709 = vmatpush1.msra.mxu0 %v71
    %710 = vmatprep.subr.mxu0 0.0
    %711 = vmatpush1.msra.mxu0 %v70
    %712 = vmatprep.subr.mxu0 0.0
    %713 = vmatpush1.msra.mxu0 %v69
    %714 = vmatprep.subr.mxu0 0.0
    %715 = vmatpush1.msra.mxu0 %v68
    %716 = vmatprep.subr.mxu0 0.0
    %717 = vmatpush1.msra.mxu0 %v67
    %718 = vmatprep.subr.mxu0 0.0
    %719 = vmatpush1.msra.mxu0 %v66
    %720 = vmatprep.subr.mxu0 0.0
    %721 = vmatpush2.msra.mxu0 0.0
    %722 = vmatprep.subr.mxu0 0.0
    %723 = vmatpush2.msra.mxu0 0.0
    %724 = vmatprep.subr.mxu0 0.0
    %725 = vmatpush2.msra.mxu0 0.0
    %726 = vmatprep.subr.mxu0 0.0
    %727 = vmatpush2.msra.mxu0 0.0
    %728 = vmatprep.subr.mxu0 0.0
    %729 = vmatpush2.msra.mxu0 0.0
    %730 = vmatprep.subr.mxu0 0.0
    %731 = vmatpush2.msra.mxu0 0.0
    %732 = vmatprep.subr.mxu0 0.0
    %733 = vmatpush2.msra.mxu0 0.0
    %734 = vmatprep.subr.mxu0 0.0
    %735 = vmatpush2.msra.mxu0 0.0
    %736 = vmatprep.subr.mxu0 0.0
    %737 = vmatpush2.msra.mxu0 0.0
    %738 = vmatprep.subr.mxu0 0.0
    %739 = vmatpush2.msra.mxu0 0.0
    %740 = vmatprep.subr.mxu0 0.0
    %741 = vmatpush2.msra.mxu0 0.0
    %742 = vmatprep.subr.mxu0 0.0
    %743 = vmatpush2.msra.mxu0 0.0
    %744 = vmatprep.subr.mxu0 0.0
    %745 = vmatpush2.msra.mxu0 0.0
    %746 = vmatprep.subr.mxu0 0.0
    %747 = vmatpush2.msra.mxu0 0.0
    %748 = vmatprep.subr.mxu0 0.0
    %749 = vmatpush2.msra.mxu0 0.0
    %750 = vmatprep.subr.mxu0 0.0
    %751 = vmatpush2.msra.mxu0 0.0
    %752 = vmatprep.mubr.f32.mxu0 0.0
    %753 = vmatmul.mubr.f32.gmra.mxu0 %v686
    %v754 = vpop.f32.mrf.mxu0
    %v755 = vadd.f32 %v174, %v754
    %v756 = vpop.f32.mrf.mxu0
    %757 = vdwg.mxu0
    %v758 = vmul.f32 %v755, 0.5
    %v759 = vtanh.pop %v758
    %v760 = vadd.f32 %v759, 1.0
    %v761 = vmul.f32 %v760, 0.5
    %v762 = vtanh.pop %v755
    %v763 = vmul.f32 %v761, %v570
    %765 = vrot.lane.b32.xlu0 %v762, 32
    %v766 = vpop.permute.xlu0 %765
    %v768 = vmul.f32 %v761, %v766
    %770 = vrot.lane.b32.xlu0 %v768, 32
    %v771 = vpop.permute.xlu0 %770
    %v773 = vadd.f32 %v763, %v771
    %v774 = vtanh.pop %v773
    %776 = vrot.lane.b32.xlu0 %v774, 32
    %v777 = vpop.permute.xlu0 %776
    %v779 = vmul.f32 %v761, %v777
    %780 = vrot.lane.b32.xlu0 %v576, 64
    %v781 = vpop.permute.xlu0 %780
    %784 = vrot.lane.b32.xlu0 %v679, 96
    %v785 = vpop.permute.xlu0 %784
    %v787 = vsel %vm168, %v781, %v785
    %v789 = vsel %vm176, %v787, 0
    %791 = vmatprep.subr.mxu0 0.0
    %792 = vmatpush1.msra.mxu0 0.0
    %793 = vmatprep.subr.mxu0 0.0
    %794 = vmatpush1.msra.mxu0 0.0
    %795 = vmatprep.subr.mxu0 0.0
    %796 = vmatpush1.msra.mxu0 0.0
    %797 = vmatprep.subr.mxu0 0.0
    %798 = vmatpush1.msra.mxu0 0.0
    %799 = vmatprep.subr.mxu0 0.0
    %800 = vmatpush1.msra.mxu0 0.0
    %801 = vmatprep.subr.mxu0 0.0
    %802 = vmatpush1.msra.mxu0 0.0
    %803 = vmatprep.subr.mxu0 0.0
    %804 = vmatpush1.msra.mxu0 0.0
    %805 = vmatprep.subr.mxu0 0.0
    %806 = vmatpush1.msra.mxu0 0.0
    %807 = vmatprep.subr.mxu0 0.0
    %808 = vmatpush1.msra.mxu0 %v82
    %809 = vmatprep.subr.mxu0 0.0
    %810 = vmatpush1.msra.mxu0 %v81
    %811 = vmatprep.subr.mxu0 0.0
    %812 = vmatpush1.msra.mxu0 %v80
    %813 = vmatprep.subr.mxu0 0.0
    %814 = vmatpush1.msra.mxu0 %v79
    %815 = vmatprep.subr.mxu0 0.0
    %816 = vmatpush1.msra.mxu0 %v78
    %817 = vmatprep.subr.mxu0 0.0
    %818 = vmatpush1.msra.mxu0 %v77
    %819 = vmatprep.subr.mxu0 0.0
    %820 = vmatpush1.msra.mxu0 %v76
    %821 = vmatprep.subr.mxu0 0.0
    %822 = vmatpush1.msra.mxu0 %v75
    %823 = vmatprep.subr.mxu0 0.0
    %824 = vmatpush2.msra.mxu0 0.0
    %825 = vmatprep.subr.mxu0 0.0
    %826 = vmatpush2.msra.mxu0 0.0
    %827 = vmatprep.subr.mxu0 0.0
    %828 = vmatpush2.msra.mxu0 0.0
    %829 = vmatprep.subr.mxu0 0.0
    %830 = vmatpush2.msra.mxu0 0.0
    %831 = vmatprep.subr.mxu0 0.0
    %832 = vmatpush2.msra.mxu0 0.0
    %833 = vmatprep.subr.mxu0 0.0
    %834 = vmatpush2.msra.mxu0 0.0
    %835 = vmatprep.subr.mxu0 0.0
    %836 = vmatpush2.msra.mxu0 0.0
    %837 = vmatprep.subr.mxu0 0.0
    %838 = vmatpush2.msra.mxu0 0.0
    %839 = vmatprep.subr.mxu0 0.0
    %840 = vmatpush2.msra.mxu0 0.0
    %841 = vmatprep.subr.mxu0 0.0
    %842 = vmatpush2.msra.mxu0 0.0
    %843 = vmatprep.subr.mxu0 0.0
    %844 = vmatpush2.msra.mxu0 0.0
    %845 = vmatprep.subr.mxu0 0.0
    %846 = vmatpush2.msra.mxu0 0.0
    %847 = vmatprep.subr.mxu0 0.0
    %848 = vmatpush2.msra.mxu0 0.0
    %849 = vmatprep.subr.mxu0 0.0
    %850 = vmatpush2.msra.mxu0 0.0
    %851 = vmatprep.subr.mxu0 0.0
    %852 = vmatpush2.msra.mxu0 0.0
    %853 = vmatprep.subr.mxu0 0.0
    %854 = vmatpush2.msra.mxu0 0.0
    %855 = vmatprep.mubr.f32.mxu0 0.0
    %856 = vmatmul.mubr.f32.gmra.mxu0 %v789
    %v857 = vpop.f32.mrf.mxu0
    %v858 = vadd.f32 %v380, %v857
    %v859 = vpop.f32.mrf.mxu0
    %860 = vdwg.mxu0
    %v861 = vmul.f32 %v858, 0.5
    %v862 = vtanh.pop %v861
    %v863 = vadd.f32 %v862, 1.0
    %v864 = vmul.f32 %v863, 0.5
    %v865 = vtanh.pop %v858
    %v866 = vmul.f32 %v864, %v673
    %868 = vrot.lane.b32.xlu0 %v865, 32
    %v869 = vpop.permute.xlu0 %868
    %v871 = vmul.f32 %v864, %v869
    %873 = vrot.lane.b32.xlu0 %v871, 32
    %v874 = vpop.permute.xlu0 %873
    %v876 = vadd.f32 %v866, %v874
    %v877 = vtanh.pop %v876
    %879 = vrot.lane.b32.xlu0 %v877, 32
    %v880 = vpop.permute.xlu0 %879
    %v882 = vmul.f32 %v864, %v880
    %884 = vrot.lane.b32.xlu0 %v779, 96
    %v885 = vpop.permute.xlu0 %884
    %v887 = vsel %vm168, %v137, %v885
    %v889 = vsel %vm176, %v887, 0
    %891 = vmatprep.subr.mxu0 0.0
    %892 = vmatpush1.msra.mxu0 0.0
    %893 = vmatprep.subr.mxu0 0.0
    %894 = vmatpush1.msra.mxu0 0.0
    %895 = vmatprep.subr.mxu0 0.0
    %896 = vmatpush1.msra.mxu0 0.0
    %897 = vmatprep.subr.mxu0 0.0
    %898 = vmatpush1.msra.mxu0 0.0
    %899 = vmatprep.subr.mxu0 0.0
    %900 = vmatpush1.msra.mxu0 0.0
    %901 = vmatprep.subr.mxu0 0.0
    %902 = vmatpush1.msra.mxu0 0.0
    %903 = vmatprep.subr.mxu0 0.0
    %904 = vmatpush1.msra.mxu0 0.0
    %905 = vmatprep.subr.mxu0 0.0
    %906 = vmatpush1.msra.mxu0 0.0
    %907 = vmatprep.subr.mxu0 0.0
    %908 = vmatpush1.msra.mxu0 %v73
    %909 = vmatprep.subr.mxu0 0.0
    %910 = vmatpush1.msra.mxu0 %v72
    %911 = vmatprep.subr.mxu0 0.0
    %912 = vmatpush1.msra.mxu0 %v71
    %913 = vmatprep.subr.mxu0 0.0
    %914 = vmatpush1.msra.mxu0 %v70
    %915 = vmatprep.subr.mxu0 0.0
    %916 = vmatpush1.msra.mxu0 %v69
    %917 = vmatprep.subr.mxu0 0.0
    %918 = vmatpush1.msra.mxu0 %v68
    %919 = vmatprep.subr.mxu0 0.0
    %920 = vmatpush1.msra.mxu0 %v67
    %921 = vmatprep.subr.mxu0 0.0
    %922 = vmatpush1.msra.mxu0 %v66
    %923 = vmatprep.subr.mxu0 0.0
    %924 = vmatpush2.msra.mxu0 0.0
    %925 = vmatprep.subr.mxu0 0.0
    %926 = vmatpush2.msra.mxu0 0.0
    %927 = vmatprep.subr.mxu0 0.0
    %928 = vmatpush2.msra.mxu0 0.0
    %929 = vmatprep.subr.mxu0 0.0
    %930 = vmatpush2.msra.mxu0 0.0
    %931 = vmatprep.subr.mxu0 0.0
    %932 = vmatpush2.msra.mxu0 0.0
    %933 = vmatprep.subr.mxu0 0.0
    %934 = vmatpush2.msra.mxu0 0.0
    %935 = vmatprep.subr.mxu0 0.0
    %936 = vmatpush2.msra.mxu0 0.0
    %937 = vmatprep.subr.mxu0 0.0
    %938 = vmatpush2.msra.mxu0 0.0
    %939 = vmatprep.subr.mxu0 0.0
    %940 = vmatpush2.msra.mxu0 0.0
    %941 = vmatprep.subr.mxu0 0.0
    %942 = vmatpush2.msra.mxu0 0.0
    %943 = vmatprep.subr.mxu0 0.0
    %944 = vmatpush2.msra.mxu0 0.0
    %945 = vmatprep.subr.mxu0 0.0
    %946 = vmatpush2.msra.mxu0 0.0
    %947 = vmatprep.subr.mxu0 0.0
    %948 = vmatpush2.msra.mxu0 0.0
    %949 = vmatprep.subr.mxu0 0.0
    %950 = vmatpush2.msra.mxu0 0.0
    %951 = vmatprep.subr.mxu0 0.0
    %952 = vmatpush2.msra.mxu0 0.0
    %953 = vmatprep.subr.mxu0 0.0
    %954 = vmatpush2.msra.mxu0 0.0
    %955 = vmatprep.mubr.f32.mxu0 0.0
    %956 = vmatmul.mubr.f32.gmra.mxu0 %v889
    %v957 = vpop.f32.mrf.mxu0
    %v958 = vadd.f32 %v174, %v957
    %v959 = vpop.f32.mrf.mxu0
    %960 = vdwg.mxu0
    %v961 = vmul.f32 %v958, 0.5
    %v962 = vtanh.pop %v961
    %v963 = vadd.f32 %v962, 1.0
    %v964 = vmul.f32 %v963, 0.5
    %v965 = vtanh.pop %v958
    %v966 = vmul.f32 %v964, %v773
    %968 = vrot.lane.b32.xlu0 %v965, 32
    %v969 = vpop.permute.xlu0 %968
    %v971 = vmul.f32 %v964, %v969
    %973 = vrot.lane.b32.xlu0 %v971, 32
    %v974 = vpop.permute.xlu0 %973
    %v976 = vadd.f32 %v966, %v974
    %v977 = vtanh.pop %v976
    %979 = vrot.lane.b32.xlu0 %v977, 32
    %v980 = vpop.permute.xlu0 %979
    %v982 = vmul.f32 %v964, %v980
    %983 = vrot.lane.b32.xlu0 %v779, 64
    %v984 = vpop.permute.xlu0 %983
    %987 = vrot.lane.b32.xlu0 %v882, 96
    %v988 = vpop.permute.xlu0 %987
    %v990 = vsel %vm168, %v984, %v988
    %v992 = vsel %vm176, %v990, 0
    %994 = vmatprep.subr.mxu0 0.0
    %995 = vmatpush1.msra.mxu0 0.0
    %996 = vmatprep.subr.mxu0 0.0
    %997 = vmatpush1.msra.mxu0 0.0
    %998 = vmatprep.subr.mxu0 0.0
    %999 = vmatpush1.msra.mxu0 0.0
    %1000 = vmatprep.subr.mxu0 0.0
    %1001 = vmatpush1.msra.mxu0 0.0
    %1002 = vmatprep.subr.mxu0 0.0
    %1003 = vmatpush1.msra.mxu0 0.0
    %1004 = vmatprep.subr.mxu0 0.0
    %1005 = vmatpush1.msra.mxu0 0.0
    %1006 = vmatprep.subr.mxu0 0.0
    %1007 = vmatpush1.msra.mxu0 0.0
    %1008 = vmatprep.subr.mxu0 0.0
    %1009 = vmatpush1.msra.mxu0 0.0
    %1010 = vmatprep.subr.mxu0 0.0
    %1011 = vmatpush1.msra.mxu0 %v82
    %1012 = vmatprep.subr.mxu0 0.0
    %1013 = vmatpush1.msra.mxu0 %v81
    %1014 = vmatprep.subr.mxu0 0.0
    %1015 = vmatpush1.msra.mxu0 %v80
    %1016 = vmatprep.subr.mxu0 0.0
    %1017 = vmatpush1.msra.mxu0 %v79
    %1018 = vmatprep.subr.mxu0 0.0
    %1019 = vmatpush1.msra.mxu0 %v78
    %1020 = vmatprep.subr.mxu0 0.0
    %1021 = vmatpush1.msra.mxu0 %v77
    %1022 = vmatprep.subr.mxu0 0.0
    %1023 = vmatpush1.msra.mxu0 %v76
    %1024 = vmatprep.subr.mxu0 0.0
    %1025 = vmatpush1.msra.mxu0 %v75
    %1026 = vmatprep.subr.mxu0 0.0
    %1027 = vmatpush2.msra.mxu0 0.0
    %1028 = vmatprep.subr.mxu0 0.0
    %1029 = vmatpush2.msra.mxu0 0.0
    %1030 = vmatprep.subr.mxu0 0.0
    %1031 = vmatpush2.msra.mxu0 0.0
    %1032 = vmatprep.subr.mxu0 0.0
    %1033 = vmatpush2.msra.mxu0 0.0
    %1034 = vmatprep.subr.mxu0 0.0
    %1035 = vmatpush2.msra.mxu0 0.0
    %1036 = vmatprep.subr.mxu0 0.0
    %1037 = vmatpush2.msra.mxu0 0.0
    %1038 = vmatprep.subr.mxu0 0.0
    %1039 = vmatpush2.msra.mxu0 0.0
    %1040 = vmatprep.subr.mxu0 0.0
    %1041 = vmatpush2.msra.mxu0 0.0
    %1042 = vmatprep.subr.mxu0 0.0
    %1043 = vmatpush2.msra.mxu0 0.0
    %1044 = vmatprep.subr.mxu0 0.0
    %1045 = vmatpush2.msra.mxu0 0.0
    %1046 = vmatprep.subr.mxu0 0.0
    %1047 = vmatpush2.msra.mxu0 0.0
    %1048 = vmatprep.subr.mxu0 0.0
    %1049 = vmatpush2.msra.mxu0 0.0
    %1050 = vmatprep.subr.mxu0 0.0
    %1051 = vmatpush2.msra.mxu0 0.0
    %1052 = vmatprep.subr.mxu0 0.0
    %1053 = vmatpush2.msra.mxu0 0.0
    %1054 = vmatprep.subr.mxu0 0.0
    %1055 = vmatpush2.msra.mxu0 0.0
    %1056 = vmatprep.subr.mxu0 0.0
    %1057 = vmatpush2.msra.mxu0 0.0
    %1058 = vmatprep.mubr.f32.mxu0 0.0
    %1059 = vmatmul.mubr.f32.gmra.mxu0 %v992
    %v1060 = vpop.f32.mrf.mxu0
    %v1061 = vadd.f32 %v380, %v1060
    %v1062 = vpop.f32.mrf.mxu0
    %1063 = vdwg.mxu0
    %v1064 = vmul.f32 %v1061, 0.5
    %v1065 = vtanh.pop %v1064
    %v1066 = vadd.f32 %v1065, 1.0
    %v1067 = vmul.f32 %v1066, 0.5
    %v1068 = vtanh.pop %v1061
    %v1069 = vmul.f32 %v1067, %v876
    %1071 = vrot.lane.b32.xlu0 %v1068, 32
    %v1072 = vpop.permute.xlu0 %1071
    %v1074 = vmul.f32 %v1067, %v1072
    %1076 = vrot.lane.b32.xlu0 %v1074, 32
    %v1077 = vpop.permute.xlu0 %1076
    %v1079 = vadd.f32 %v1069, %v1077
    %v1080 = vtanh.pop %v1079
    %1082 = vrot.lane.b32.xlu0 %v1080, 32
    %v1083 = vpop.permute.xlu0 %1082
    %v1085 = vmul.f32 %v1067, %v1083
    %1087 = vrot.lane.b32.xlu0 %v982, 96
    %v1088 = vpop.permute.xlu0 %1087
    %v1090 = vsel %vm168, %v147, %v1088
    %v1092 = vsel %vm176, %v1090, 0
    %1094 = vmatprep.subr.mxu0 0.0
    %1095 = vmatpush1.msra.mxu0 0.0
    %1096 = vmatprep.subr.mxu0 0.0
    %1097 = vmatpush1.msra.mxu0 0.0
    %1098 = vmatprep.subr.mxu0 0.0
    %1099 = vmatpush1.msra.mxu0 0.0
    %1100 = vmatprep.subr.mxu0 0.0
    %1101 = vmatpush1.msra.mxu0 0.0
    %1102 = vmatprep.subr.mxu0 0.0
    %1103 = vmatpush1.msra.mxu0 0.0
    %1104 = vmatprep.subr.mxu0 0.0
    %1105 = vmatpush1.msra.mxu0 0.0
    %1106 = vmatprep.subr.mxu0 0.0
    %1107 = vmatpush1.msra.mxu0 0.0
    %1108 = vmatprep.subr.mxu0 0.0
    %1109 = vmatpush1.msra.mxu0 0.0
    %1110 = vmatprep.subr.mxu0 0.0
    %1111 = vmatpush1.msra.mxu0 %v73
    %1112 = vmatprep.subr.mxu0 0.0
    %1113 = vmatpush1.msra.mxu0 %v72
    %1114 = vmatprep.subr.mxu0 0.0
    %1115 = vmatpush1.msra.mxu0 %v71
    %1116 = vmatprep.subr.mxu0 0.0
    %1117 = vmatpush1.msra.mxu0 %v70
    %1118 = vmatprep.subr.mxu0 0.0
    %1119 = vmatpush1.msra.mxu0 %v69
    %1120 = vmatprep.subr.mxu0 0.0
    %1121 = vmatpush1.msra.mxu0 %v68
    %1122 = vmatprep.subr.mxu0 0.0
    %1123 = vmatpush1.msra.mxu0 %v67
    %1124 = vmatprep.subr.mxu0 0.0
    %1125 = vmatpush1.msra.mxu0 %v66
    %1126 = vmatprep.subr.mxu0 0.0
    %1127 = vmatpush2.msra.mxu0 0.0
    %1128 = vmatprep.subr.mxu0 0.0
    %1129 = vmatpush2.msra.mxu0 0.0
    %1130 = vmatprep.subr.mxu0 0.0
    %1131 = vmatpush2.msra.mxu0 0.0
    %1132 = vmatprep.subr.mxu0 0.0
    %1133 = vmatpush2.msra.mxu0 0.0
    %1134 = vmatprep.subr.mxu0 0.0
    %1135 = vmatpush2.msra.mxu0 0.0
    %1136 = vmatprep.subr.mxu0 0.0
    %1137 = vmatpush2.msra.mxu0 0.0
    %1138 = vmatprep.subr.mxu0 0.0
    %1139 = vmatpush2.msra.mxu0 0.0
    %1140 = vmatprep.subr.mxu0 0.0
    %1141 = vmatpush2.msra.mxu0 0.0
    %1142 = vmatprep.subr.mxu0 0.0
    %1143 = vmatpush2.msra.mxu0 0.0
    %1144 = vmatprep.subr.mxu0 0.0
    %1145 = vmatpush2.msra.mxu0 0.0
    %1146 = vmatprep.subr.mxu0 0.0
    %1147 = vmatpush2.msra.mxu0 0.0
    %1148 = vmatprep.subr.mxu0 0.0
    %1149 = vmatpush2.msra.mxu0 0.0
    %1150 = vmatprep.subr.mxu0 0.0
    %1151 = vmatpush2.msra.mxu0 0.0
    %1152 = vmatprep.subr.mxu0 0.0
    %1153 = vmatpush2.msra.mxu0 0.0
    %1154 = vmatprep.subr.mxu0 0.0
    %1155 = vmatpush2.msra.mxu0 0.0
    %1156 = vmatprep.subr.mxu0 0.0
    %1157 = vmatpush2.msra.mxu0 0.0
    %1158 = vmatprep.mubr.f32.mxu0 0.0
    %1159 = vmatmul.mubr.f32.gmra.mxu0 %v1092
    %v1160 = vpop.f32.mrf.mxu0
    %v1161 = vadd.f32 %v174, %v1160
    %v1162 = vpop.f32.mrf.mxu0
    %1163 = vdwg.mxu0
    %v1164 = vmul.f32 %v1161, 0.5
    %v1165 = vtanh.pop %v1164
    %v1166 = vadd.f32 %v1165, 1.0
    %v1167 = vmul.f32 %v1166, 0.5
    %v1168 = vtanh.pop %v1161
    %v1169 = vmul.f32 %v1167, %v976
    %1171 = vrot.lane.b32.xlu0 %v1168, 32
    %v1172 = vpop.permute.xlu0 %1171
    %v1174 = vmul.f32 %v1167, %v1172
    %1176 = vrot.lane.b32.xlu0 %v1174, 32
    %v1177 = vpop.permute.xlu0 %1176
    %v1179 = vadd.f32 %v1169, %v1177
    %v1180 = vtanh.pop %v1179
    %1182 = vrot.lane.b32.xlu0 %v1180, 32
    %v1183 = vpop.permute.xlu0 %1182
    %v1185 = vmul.f32 %v1167, %v1183
    %1186 = vrot.lane.b32.xlu0 %v982, 64
    %v1187 = vpop.permute.xlu0 %1186
    %1190 = vrot.lane.b32.xlu0 %v1085, 96
    %v1191 = vpop.permute.xlu0 %1190
    %v1193 = vsel %vm168, %v1187, %v1191
    %v1195 = vsel %vm176, %v1193, 0
    %1197 = vmatprep.subr.mxu0 0.0
    %1198 = vmatpush1.msra.mxu0 0.0
    %1199 = vmatprep.subr.mxu0 0.0
    %1200 = vmatpush1.msra.mxu0 0.0
    %1201 = vmatprep.subr.mxu0 0.0
    %1202 = vmatpush1.msra.mxu0 0.0
    %1203 = vmatprep.subr.mxu0 0.0
    %1204 = vmatpush1.msra.mxu0 0.0
    %1205 = vmatprep.subr.mxu0 0.0
    %1206 = vmatpush1.msra.mxu0 0.0
    %1207 = vmatprep.subr.mxu0 0.0
    %1208 = vmatpush1.msra.mxu0 0.0
    %1209 = vmatprep.subr.mxu0 0.0
    %1210 = vmatpush1.msra.mxu0 0.0
    %1211 = vmatprep.subr.mxu0 0.0
    %1212 = vmatpush1.msra.mxu0 0.0
    %1213 = vmatprep.subr.mxu0 0.0
    %1214 = vmatpush1.msra.mxu0 %v82
    %1215 = vmatprep.subr.mxu0 0.0
    %1216 = vmatpush1.msra.mxu0 %v81
    %1217 = vmatprep.subr.mxu0 0.0
    %1218 = vmatpush1.msra.mxu0 %v80
    %1219 = vmatprep.subr.mxu0 0.0
    %1220 = vmatpush1.msra.mxu0 %v79
    %1221 = vmatprep.subr.mxu0 0.0
    %1222 = vmatpush1.msra.mxu0 %v78
    %1223 = vmatprep.subr.mxu0 0.0
    %1224 = vmatpush1.msra.mxu0 %v77
    %1225 = vmatprep.subr.mxu0 0.0
    %1226 = vmatpush1.msra.mxu0 %v76
    %1227 = vmatprep.subr.mxu0 0.0
    %1228 = vmatpush1.msra.mxu0 %v75
    %1229 = vmatprep.subr.mxu0 0.0
    %1230 = vmatpush2.msra.mxu0 0.0
    %1231 = vmatprep.subr.mxu0 0.0
    %1232 = vmatpush2.msra.mxu0 0.0
    %1233 = vmatprep.subr.mxu0 0.0
    %1234 = vmatpush2.msra.mxu0 0.0
    %1235 = vmatprep.subr.mxu0 0.0
    %1236 = vmatpush2.msra.mxu0 0.0
    %1237 = vmatprep.subr.mxu0 0.0
    %1238 = vmatpush2.msra.mxu0 0.0
    %1239 = vmatprep.subr.mxu0 0.0
    %1240 = vmatpush2.msra.mxu0 0.0
    %1241 = vmatprep.subr.mxu0 0.0
    %1242 = vmatpush2.msra.mxu0 0.0
    %1243 = vmatprep.subr.mxu0 0.0
    %1244 = vmatpush2.msra.mxu0 0.0
    %1245 = vmatprep.subr.mxu0 0.0
    %1246 = vmatpush2.msra.mxu0 0.0
    %1247 = vmatprep.subr.mxu0 0.0
    %1248 = vmatpush2.msra.mxu0 0.0
    %1249 = vmatprep.subr.mxu0 0.0
    %1250 = vmatpush2.msra.mxu0 0.0
    %1251 = vmatprep.subr.mxu0 0.0
    %1252 = vmatpush2.msra.mxu0 0.0
    %1253 = vmatprep.subr.mxu0 0.0
    %1254 = vmatpush2.msra.mxu0 0.0
    %1255 = vmatprep.subr.mxu0 0.0
    %1256 = vmatpush2.msra.mxu0 0.0
    %1257 = vmatprep.subr.mxu0 0.0
    %1258 = vmatpush2.msra.mxu0 0.0
    %1259 = vmatprep.subr.mxu0 0.0
    %1260 = vmatpush2.msra.mxu0 0.0
    %1261 = vmatprep.mubr.f32.mxu0 0.0
    %1262 = vmatmul.mubr.f32.gmra.mxu0 %v1195
    %v1263 = vpop.f32.mrf.mxu0
    %v1264 = vadd.f32 %v380, %v1263
    %v1265 = vpop.f32.mrf.mxu0
    %1266 = vdwg.mxu0
    %v1267 = vmul.f32 %v1264, 0.5
    %v1268 = vtanh.pop %v1267
    %v1269 = vadd.f32 %v1268, 1.0
    %v1270 = vmul.f32 %v1269, 0.5
    %v1271 = vtanh.pop %v1264
    %v1272 = vmul.f32 %v1270, %v1079
    %1274 = vrot.lane.b32.xlu0 %v1271, 32
    %v1275 = vpop.permute.xlu0 %1274
    %v1277 = vmul.f32 %v1270, %v1275
    %1279 = vrot.lane.b32.xlu0 %v1277, 32
    %v1280 = vpop.permute.xlu0 %1279
    %v1282 = vadd.f32 %v1272, %v1280
    %v1283 = vtanh.pop %v1282
    %1285 = vrot.lane.b32.xlu0 %v1283, 32
    %v1286 = vpop.permute.xlu0 %1285
    %v1288 = vmul.f32 %v1270, %v1286
    %1290 = vrot.lane.b32.xlu0 %v1185, 96
    %v1291 = vpop.permute.xlu0 %1290
    %v1293 = vsel %vm168, %v157, %v1291
    %v1295 = vsel %vm176, %v1293, 0
    %1297 = vmatprep.subr.mxu0 0.0
    %1298 = vmatpush1.msra.mxu0 0.0
    %1299 = vmatprep.subr.mxu0 0.0
    %1300 = vmatpush1.msra.mxu0 0.0
    %1301 = vmatprep.subr.mxu0 0.0
    %1302 = vmatpush1.msra.mxu0 0.0
    %1303 = vmatprep.subr.mxu0 0.0
    %1304 = vmatpush1.msra.mxu0 0.0
    %1305 = vmatprep.subr.mxu0 0.0
    %1306 = vmatpush1.msra.mxu0 0.0
    %1307 = vmatprep.subr.mxu0 0.0
    %1308 = vmatpush1.msra.mxu0 0.0
    %1309 = vmatprep.subr.mxu0 0.0
    %1310 = vmatpush1.msra.mxu0 0.0
    %1311 = vmatprep.subr.mxu0 0.0
    %1312 = vmatpush1.msra.mxu0 0.0
    %1313 = vmatprep.subr.mxu0 0.0
    %1314 = vmatpush1.msra.mxu0 %v73
    %1315 = vmatprep.subr.mxu0 0.0
    %1316 = vmatpush1.msra.mxu0 %v72
    %1317 = vmatprep.subr.mxu0 0.0
    %1318 = vmatpush1.msra.mxu0 %v71
    %1319 = vmatprep.subr.mxu0 0.0
    %1320 = vmatpush1.msra.mxu0 %v70
    %1321 = vmatprep.subr.mxu0 0.0
    %1322 = vmatpush1.msra.mxu0 %v69
    %1323 = vmatprep.subr.mxu0 0.0
    %1324 = vmatpush1.msra.mxu0 %v68
    %1325 = vmatprep.subr.mxu0 0.0
    %1326 = vmatpush1.msra.mxu0 %v67
    %1327 = vmatprep.subr.mxu0 0.0
    %1328 = vmatpush1.msra.mxu0 %v66
    %1329 = vmatprep.subr.mxu0 0.0
    %1330 = vmatpush2.msra.mxu0 0.0
    %1331 = vmatprep.subr.mxu0 0.0
    %1332 = vmatpush2.msra.mxu0 0.0
    %1333 = vmatprep.subr.mxu0 0.0
    %1334 = vmatpush2.msra.mxu0 0.0
    %1335 = vmatprep.subr.mxu0 0.0
    %1336 = vmatpush2.msra.mxu0 0.0
    %1337 = vmatprep.subr.mxu0 0.0
    %1338 = vmatpush2.msra.mxu0 0.0
    %1339 = vmatprep.subr.mxu0 0.0
    %1340 = vmatpush2.msra.mxu0 0.0
    %1341 = vmatprep.subr.mxu0 0.0
    %1342 = vmatpush2.msra.mxu0 0.0
    %1343 = vmatprep.subr.mxu0 0.0
    %1344 = vmatpush2.msra.mxu0 0.0
    %1345 = vmatprep.subr.mxu0 0.0
    %1346 = vmatpush2.msra.mxu0 0.0
    %1347 = vmatprep.subr.mxu0 0.0
    %1348 = vmatpush2.msra.mxu0 0.0
    %1349 = vmatprep.subr.mxu0 0.0
    %1350 = vmatpush2.msra.mxu0 0.0
    %1351 = vmatprep.subr.mxu0 0.0
    %1352 = vmatpush2.msra.mxu0 0.0
    %1353 = vmatprep.subr.mxu0 0.0
    %1354 = vmatpush2.msra.mxu0 0.0
    %1355 = vmatprep.subr.mxu0 0.0
    %1356 = vmatpush2.msra.mxu0 0.0
    %1357 = vmatprep.subr.mxu0 0.0
    %1358 = vmatpush2.msra.mxu0 0.0
    %1359 = vmatprep.subr.mxu0 0.0
    %1360 = vmatpush2.msra.mxu0 0.0
    %1361 = vmatprep.mubr.f32.mxu0 0.0
    %1362 = vmatmul.mubr.f32.gmra.mxu0 %v1295
    %v1363 = vpop.f32.mrf.mxu0
    %v1364 = vadd.f32 %v174, %v1363
    %v1365 = vpop.f32.mrf.mxu0
    %1366 = vdwg.mxu0
    %v1367 = vmul.f32 %v1364, 0.5
    %v1368 = vtanh.pop %v1367
    %v1369 = vadd.f32 %v1368, 1.0
    %v1370 = vmul.f32 %v1369, 0.5
    %v1371 = vtanh.pop %v1364
    %v1372 = vmul.f32 %v1370, %v1179
    %1374 = vrot.lane.b32.xlu0 %v1371, 32
    %v1375 = vpop.permute.xlu0 %1374
    %v1377 = vmul.f32 %v1370, %v1375
    %1379 = vrot.lane.b32.xlu0 %v1377, 32
    %v1380 = vpop.permute.xlu0 %1379
    %v1382 = vadd.f32 %v1372, %v1380
    %v1383 = vtanh.pop %v1382
    %1385 = vrot.lane.b32.xlu0 %v1383, 32
    %v1386 = vpop.permute.xlu0 %1385
    %v1388 = vmul.f32 %v1370, %v1386
    %1389 = vrot.lane.b32.xlu0 %v1185, 64
    %v1390 = vpop.permute.xlu0 %1389
    %1393 = vrot.lane.b32.xlu0 %v1288, 96
    %v1394 = vpop.permute.xlu0 %1393
    %v1396 = vsel %vm168, %v1390, %v1394
    %v1398 = vsel %vm176, %v1396, 0
    %1400 = vmatprep.subr.mxu0 0.0
    %1401 = vmatpush1.msra.mxu0 0.0
    %1402 = vmatprep.subr.mxu0 0.0
    %1403 = vmatpush1.msra.mxu0 0.0
    %1404 = vmatprep.subr.mxu0 0.0
    %1405 = vmatpush1.msra.mxu0 0.0
    %1406 = vmatprep.subr.mxu0 0.0
    %1407 = vmatpush1.msra.mxu0 0.0
    %1408 = vmatprep.subr.mxu0 0.0
    %1409 = vmatpush1.msra.mxu0 0.0
    %1410 = vmatprep.subr.mxu0 0.0
    %1411 = vmatpush1.msra.mxu0 0.0
    %1412 = vmatprep.subr.mxu0 0.0
    %1413 = vmatpush1.msra.mxu0 0.0
    %1414 = vmatprep.subr.mxu0 0.0
    %1415 = vmatpush1.msra.mxu0 0.0
    %1416 = vmatprep.subr.mxu0 0.0
    %1417 = vmatpush1.msra.mxu0 %v82
    %1418 = vmatprep.subr.mxu0 0.0
    %1419 = vmatpush1.msra.mxu0 %v81
    %1420 = vmatprep.subr.mxu0 0.0
    %1421 = vmatpush1.msra.mxu0 %v80
    %1422 = vmatprep.subr.mxu0 0.0
    %1423 = vmatpush1.msra.mxu0 %v79
    %1424 = vmatprep.subr.mxu0 0.0
    %1425 = vmatpush1.msra.mxu0 %v78
    %1426 = vmatprep.subr.mxu0 0.0
    %1427 = vmatpush1.msra.mxu0 %v77
    %1428 = vmatprep.subr.mxu0 0.0
    %1429 = vmatpush1.msra.mxu0 %v76
    %1430 = vmatprep.subr.mxu0 0.0
    %1431 = vmatpush1.msra.mxu0 %v75
    %1432 = vmatprep.subr.mxu0 0.0
    %1433 = vmatpush2.msra.mxu0 0.0
    %1434 = vmatprep.subr.mxu0 0.0
    %1435 = vmatpush2.msra.mxu0 0.0
    %1436 = vmatprep.subr.mxu0 0.0
    %1437 = vmatpush2.msra.mxu0 0.0
    %1438 = vmatprep.subr.mxu0 0.0
    %1439 = vmatpush2.msra.mxu0 0.0
    %1440 = vmatprep.subr.mxu0 0.0
    %1441 = vmatpush2.msra.mxu0 0.0
    %1442 = vmatprep.subr.mxu0 0.0
    %1443 = vmatpush2.msra.mxu0 0.0
    %1444 = vmatprep.subr.mxu0 0.0
    %1445 = vmatpush2.msra.mxu0 0.0
    %1446 = vmatprep.subr.mxu0 0.0
    %1447 = vmatpush2.msra.mxu0 0.0
    %1448 = vmatprep.subr.mxu0 0.0
    %1449 = vmatpush2.msra.mxu0 0.0
    %1450 = vmatprep.subr.mxu0 0.0
    %1451 = vmatpush2.msra.mxu0 0.0
    %1452 = vmatprep.subr.mxu0 0.0
    %1453 = vmatpush2.msra.mxu0 0.0
    %1454 = vmatprep.subr.mxu0 0.0
    %1455 = vmatpush2.msra.mxu0 0.0
    %1456 = vmatprep.subr.mxu0 0.0
    %1457 = vmatpush2.msra.mxu0 0.0
    %1458 = vmatprep.subr.mxu0 0.0
    %1459 = vmatpush2.msra.mxu0 0.0
    %1460 = vmatprep.subr.mxu0 0.0
    %1461 = vmatpush2.msra.mxu0 0.0
    %1462 = vmatprep.subr.mxu0 0.0
    %1463 = vmatpush2.msra.mxu0 0.0
    %1464 = vmatprep.mubr.f32.mxu0 0.0
    %1465 = vmatmul.mubr.f32.gmra.mxu0 %v1398
    %v1466 = vpop.f32.mrf.mxu0
    %v1467 = vadd.f32 %v380, %v1466
    %v1468 = vpop.f32.mrf.mxu0
    %1469 = vdwg.mxu0
    %v1470 = vmul.f32 %v1467, 0.5
    %v1471 = vtanh.pop %v1470
    %v1472 = vadd.f32 %v1471, 1.0
    %v1473 = vmul.f32 %v1472, 0.5
    %v1474 = vtanh.pop %v1467
    %v1475 = vmul.f32 %v1473, %v1282
    %1477 = vrot.lane.b32.xlu0 %v1474, 32
    %v1478 = vpop.permute.xlu0 %1477
    %v1480 = vmul.f32 %v1473, %v1478
    %1482 = vrot.lane.b32.xlu0 %v1480, 32
    %v1483 = vpop.permute.xlu0 %1482
    %v1485 = vadd.f32 %v1475, %v1483
    %v1486 = vtanh.pop %v1485
    %1488 = vrot.lane.b32.xlu0 %v1486, 32
    %v1489 = vpop.permute.xlu0 %1488
    %v1491 = vmul.f32 %v1473, %v1489
    %1493 = vrot.lane.b32.xlu0 %v1388, 96
    %v1494 = vpop.permute.xlu0 %1493
    %v1496 = vsel %vm168, %v167, %v1494
    %v1498 = vsel %vm176, %v1496, 0
    %1500 = vmatprep.subr.mxu0 0.0
    %1501 = vmatpush1.msra.mxu0 0.0
    %1502 = vmatprep.subr.mxu0 0.0
    %1503 = vmatpush1.msra.mxu0 0.0
    %1504 = vmatprep.subr.mxu0 0.0
    %1505 = vmatpush1.msra.mxu0 0.0
    %1506 = vmatprep.subr.mxu0 0.0
    %1507 = vmatpush1.msra.mxu0 0.0
    %1508 = vmatprep.subr.mxu0 0.0
    %1509 = vmatpush1.msra.mxu0 0.0
    %1510 = vmatprep.subr.mxu0 0.0
    %1511 = vmatpush1.msra.mxu0 0.0
    %1512 = vmatprep.subr.mxu0 0.0
    %1513 = vmatpush1.msra.mxu0 0.0
    %1514 = vmatprep.subr.mxu0 0.0
    %1515 = vmatpush1.msra.mxu0 0.0
    %1516 = vmatprep.subr.mxu0 0.0
    %1517 = vmatpush1.msra.mxu0 %v73
    %1518 = vmatprep.subr.mxu0 0.0
    %1519 = vmatpush1.msra.mxu0 %v72
    %1520 = vmatprep.subr.mxu0 0.0
    %1521 = vmatpush1.msra.mxu0 %v71
    %1522 = vmatprep.subr.mxu0 0.0
    %1523 = vmatpush1.msra.mxu0 %v70
    %1524 = vmatprep.subr.mxu0 0.0
    %1525 = vmatpush1.msra.mxu0 %v69
    %1526 = vmatprep.subr.mxu0 0.0
    %1527 = vmatpush1.msra.mxu0 %v68
    %1528 = vmatprep.subr.mxu0 0.0
    %1529 = vmatpush1.msra.mxu0 %v67
    %1530 = vmatprep.subr.mxu0 0.0
    %1531 = vmatpush1.msra.mxu0 %v66
    %1532 = vmatprep.subr.mxu0 0.0
    %1533 = vmatpush2.msra.mxu0 0.0
    %1534 = vmatprep.subr.mxu0 0.0
    %1535 = vmatpush2.msra.mxu0 0.0
    %1536 = vmatprep.subr.mxu0 0.0
    %1537 = vmatpush2.msra.mxu0 0.0
    %1538 = vmatprep.subr.mxu0 0.0
    %1539 = vmatpush2.msra.mxu0 0.0
    %1540 = vmatprep.subr.mxu0 0.0
    %1541 = vmatpush2.msra.mxu0 0.0
    %1542 = vmatprep.subr.mxu0 0.0
    %1543 = vmatpush2.msra.mxu0 0.0
    %1544 = vmatprep.subr.mxu0 0.0
    %1545 = vmatpush2.msra.mxu0 0.0
    %1546 = vmatprep.subr.mxu0 0.0
    %1547 = vmatpush2.msra.mxu0 0.0
    %1548 = vmatprep.subr.mxu0 0.0
    %1549 = vmatpush2.msra.mxu0 0.0
    %1550 = vmatprep.subr.mxu0 0.0
    %1551 = vmatpush2.msra.mxu0 0.0
    %1552 = vmatprep.subr.mxu0 0.0
    %1553 = vmatpush2.msra.mxu0 0.0
    %1554 = vmatprep.subr.mxu0 0.0
    %1555 = vmatpush2.msra.mxu0 0.0
    %1556 = vmatprep.subr.mxu0 0.0
    %1557 = vmatpush2.msra.mxu0 0.0
    %1558 = vmatprep.subr.mxu0 0.0
    %1559 = vmatpush2.msra.mxu0 0.0
    %1560 = vmatprep.subr.mxu0 0.0
    %1561 = vmatpush2.msra.mxu0 0.0
    %1562 = vmatprep.subr.mxu0 0.0
    %1563 = vmatpush2.msra.mxu0 0.0
    %1564 = vmatprep.mubr.f32.mxu0 0.0
    %1565 = vmatmul.mubr.f32.gmra.mxu0 %v1498
    %v1566 = vpop.f32.mrf.mxu0
    %v1567 = vadd.f32 %v174, %v1566
    %v1568 = vpop.f32.mrf.mxu0
    %1569 = vdwg.mxu0
    %v1570 = vmul.f32 %v1567, 0.5
    %v1571 = vtanh.pop %v1570
    %v1572 = vadd.f32 %v1571, 1.0
    %v1573 = vmul.f32 %v1572, 0.5
    %v1574 = vtanh.pop %v1567
    %v1575 = vmul.f32 %v1573, %v1382
    %1577 = vrot.lane.b32.xlu0 %v1574, 32
    %v1578 = vpop.permute.xlu0 %1577
    %v1580 = vmul.f32 %v1573, %v1578
    %1582 = vrot.lane.b32.xlu0 %v1580, 32
    %v1583 = vpop.permute.xlu0 %1582
    %v1585 = vadd.f32 %v1575, %v1583
    %v1586 = vtanh.pop %v1585
    %1588 = vrot.lane.b32.xlu0 %v1586, 32
    %v1589 = vpop.permute.xlu0 %1588
    %v1591 = vmul.f32 %v1573, %v1589
    %1592 = vrot.lane.b32.xlu0 %v1388, 64
    %v1593 = vpop.permute.xlu0 %1592
    %1596 = vrot.lane.b32.xlu0 %v1491, 96
    %v1597 = vpop.permute.xlu0 %1596
    %v1599 = vsel %vm168, %v1593, %v1597
    %v1601 = vsel %vm176, %v1599, 0
    %1603 = vmatprep.subr.mxu0 0.0
    %1604 = vmatpush1.msra.mxu0 0.0
    %1605 = vmatprep.subr.mxu0 0.0
    %1606 = vmatpush1.msra.mxu0 0.0
    %1607 = vmatprep.subr.mxu0 0.0
    %1608 = vmatpush1.msra.mxu0 0.0
    %1609 = vmatprep.subr.mxu0 0.0
    %1610 = vmatpush1.msra.mxu0 0.0
    %1611 = vmatprep.subr.mxu0 0.0
    %1612 = vmatpush1.msra.mxu0 0.0
    %1613 = vmatprep.subr.mxu0 0.0
    %1614 = vmatpush1.msra.mxu0 0.0
    %1615 = vmatprep.subr.mxu0 0.0
    %1616 = vmatpush1.msra.mxu0 0.0
    %1617 = vmatprep.subr.mxu0 0.0
    %1618 = vmatpush1.msra.mxu0 0.0
    %1619 = vmatprep.subr.mxu0 0.0
    %1620 = vmatpush1.msra.mxu0 %v82
    %1621 = vmatprep.subr.mxu0 0.0
    %1622 = vmatpush1.msra.mxu0 %v81
    %1623 = vmatprep.subr.mxu0 0.0
    %1624 = vmatpush1.msra.mxu0 %v80
    %1625 = vmatprep.subr.mxu0 0.0
    %1626 = vmatpush1.msra.mxu0 %v79
    %1627 = vmatprep.subr.mxu0 0.0
    %1628 = vmatpush1.msra.mxu0 %v78
    %1629 = vmatprep.subr.mxu0 0.0
    %1630 = vmatpush1.msra.mxu0 %v77
    %1631 = vmatprep.subr.mxu0 0.0
    %1632 = vmatpush1.msra.mxu0 %v76
    %1633 = vmatprep.subr.mxu0 0.0
    %1634 = vmatpush1.msra.mxu0 %v75
    %1635 = vmatprep.subr.mxu0 0.0
    %1636 = vmatpush2.msra.mxu0 0.0
    %1637 = vmatprep.subr.mxu0 0.0
    %1638 = vmatpush2.msra.mxu0 0.0
    %1639 = vmatprep.subr.mxu0 0.0
    %1640 = vmatpush2.msra.mxu0 0.0
    %1641 = vmatprep.subr.mxu0 0.0
    %1642 = vmatpush2.msra.mxu0 0.0
    %1643 = vmatprep.subr.mxu0 0.0
    %1644 = vmatpush2.msra.mxu0 0.0
    %1645 = vmatprep.subr.mxu0 0.0
    %1646 = vmatpush2.msra.mxu0 0.0
    %1647 = vmatprep.subr.mxu0 0.0
    %1648 = vmatpush2.msra.mxu0 0.0
    %1649 = vmatprep.subr.mxu0 0.0
    %1650 = vmatpush2.msra.mxu0 0.0
    %1651 = vmatprep.subr.mxu0 0.0
    %1652 = vmatpush2.msra.mxu0 0.0
    %1653 = vmatprep.subr.mxu0 0.0
    %1654 = vmatpush2.msra.mxu0 0.0
    %1655 = vmatprep.subr.mxu0 0.0
    %1656 = vmatpush2.msra.mxu0 0.0
    %1657 = vmatprep.subr.mxu0 0.0
    %1658 = vmatpush2.msra.mxu0 0.0
    %1659 = vmatprep.subr.mxu0 0.0
    %1660 = vmatpush2.msra.mxu0 0.0
    %1661 = vmatprep.subr.mxu0 0.0
    %1662 = vmatpush2.msra.mxu0 0.0
    %1663 = vmatprep.subr.mxu0 0.0
    %1664 = vmatpush2.msra.mxu0 0.0
    %1665 = vmatprep.subr.mxu0 0.0
    %1666 = vmatpush2.msra.mxu0 0.0
    %1667 = vmatprep.mubr.f32.mxu0 0.0
    %1668 = vmatmul.mubr.f32.gmra.mxu0 %v1601
    %v1669 = vpop.f32.mrf.mxu0
    %v1670 = vadd.f32 %v380, %v1669
    %v1671 = vpop.f32.mrf.mxu0
    %1672 = vdwg.mxu0
    %v1673 = vmul.f32 %v1670, 0.5
    %v1674 = vtanh.pop %v1673
    %v1675 = vadd.f32 %v1674, 1.0
    %v1676 = vmul.f32 %v1675, 0.5
    %v1677 = vtanh.pop %v1670
    %v1678 = vmul.f32 %v1676, %v1485
    %1680 = vrot.lane.b32.xlu0 %v1677, 32
    %v1681 = vpop.permute.xlu0 %1680
    %v1683 = vmul.f32 %v1676, %v1681
    %1685 = vrot.lane.b32.xlu0 %v1683, 32
    %v1686 = vpop.permute.xlu0 %1685
    %v1688 = vadd.f32 %v1678, %v1686
    %v1689 = vtanh.pop %v1688
    %1691 = vrot.lane.b32.xlu0 %v1689, 32
    %v1692 = vpop.permute.xlu0 %1691
    %v1694 = vmul.f32 %v1676, %v1692
    %1696 = vrot.lane.b32.xlu0 %v1591, 64
    %v1697 = vpop.permute.xlu0 %1696
    %1700 = vrot.lane.b32.xlu0 %v1694, 96
    %v1701 = vpop.permute.xlu0 %1700
    %v1703 = vsel %vm168, %v1697, %v1701
    %v1705 = vsel %vm176, %v1703, 0
    %1707 = vmatprep.subr.mxu0 0.0
    %1708 = vmatpush1.msra.mxu0 0.0
    %1709 = vmatprep.subr.mxu0 0.0
    %1710 = vmatpush1.msra.mxu0 0.0
    %1711 = vmatprep.subr.mxu0 0.0
    %1712 = vmatpush1.msra.mxu0 0.0
    %1713 = vmatprep.subr.mxu0 0.0
    %1714 = vmatpush1.msra.mxu0 0.0
    %1715 = vmatprep.subr.mxu0 0.0
    %1716 = vmatpush1.msra.mxu0 0.0
    %1717 = vmatprep.subr.mxu0 0.0
    %1718 = vmatpush1.msra.mxu0 0.0
    %1719 = vmatprep.subr.mxu0 0.0
    %1720 = vmatpush1.msra.mxu0 0.0
    %1721 = vmatprep.subr.mxu0 0.0
    %1722 = vmatpush1.msra.mxu0 0.0
    %1723 = vmatprep.subr.mxu0 0.0
    %1724 = vmatpush1.msra.mxu0 %v82
    %1725 = vmatprep.subr.mxu0 0.0
    %1726 = vmatpush1.msra.mxu0 %v81
    %1727 = vmatprep.subr.mxu0 0.0
    %1728 = vmatpush1.msra.mxu0 %v80
    %1729 = vmatprep.subr.mxu0 0.0
    %1730 = vmatpush1.msra.mxu0 %v79
    %1731 = vmatprep.subr.mxu0 0.0
    %1732 = vmatpush1.msra.mxu0 %v78
    %1733 = vmatprep.subr.mxu0 0.0
    %1734 = vmatpush1.msra.mxu0 %v77
    %1735 = vmatprep.subr.mxu0 0.0
    %1736 = vmatpush1.msra.mxu0 %v76
    %1737 = vmatprep.subr.mxu0 0.0
    %1738 = vmatpush1.msra.mxu0 %v75
    %1739 = vmatprep.subr.mxu0 0.0
    %1740 = vmatpush2.msra.mxu0 0.0
    %1741 = vmatprep.subr.mxu0 0.0
    %1742 = vmatpush2.msra.mxu0 0.0
    %1743 = vmatprep.subr.mxu0 0.0
    %1744 = vmatpush2.msra.mxu0 0.0
    %1745 = vmatprep.subr.mxu0 0.0
    %1746 = vmatpush2.msra.mxu0 0.0
    %1747 = vmatprep.subr.mxu0 0.0
    %1748 = vmatpush2.msra.mxu0 0.0
    %1749 = vmatprep.subr.mxu0 0.0
    %1750 = vmatpush2.msra.mxu0 0.0
    %1751 = vmatprep.subr.mxu0 0.0
    %1752 = vmatpush2.msra.mxu0 0.0
    %1753 = vmatprep.subr.mxu0 0.0
    %1754 = vmatpush2.msra.mxu0 0.0
    %1755 = vmatprep.subr.mxu0 0.0
    %1756 = vmatpush2.msra.mxu0 0.0
    %1757 = vmatprep.subr.mxu0 0.0
    %1758 = vmatpush2.msra.mxu0 0.0
    %1759 = vmatprep.subr.mxu0 0.0
    %1760 = vmatpush2.msra.mxu0 0.0
    %1761 = vmatprep.subr.mxu0 0.0
    %1762 = vmatpush2.msra.mxu0 0.0
    %1763 = vmatprep.subr.mxu0 0.0
    %1764 = vmatpush2.msra.mxu0 0.0
    %1765 = vmatprep.subr.mxu0 0.0
    %1766 = vmatpush2.msra.mxu0 0.0
    %1767 = vmatprep.subr.mxu0 0.0
    %1768 = vmatpush2.msra.mxu0 0.0
    %1769 = vmatprep.subr.mxu0 0.0
    %1770 = vmatpush2.msra.mxu0 0.0
    %1771 = vmatprep.mubr.f32.mxu0 0.0
    %1772 = vmatmul.mubr.f32.gmra.mxu0 %v1705
    %v1773 = vpop.f32.mrf.mxu0
    %v1774 = vadd.f32 %v380, %v1773
    %v1775 = vpop.f32.mrf.mxu0
    %1776 = vdwg.mxu0
    %v1777 = vmul.f32 %v1774, 0.5
    %v1778 = vtanh.pop %v1777
    %v1779 = vadd.f32 %v1778, 1.0
    %v1780 = vmul.f32 %v1779, 0.5
    %v1781 = vtanh.pop %v1774
    %v1782 = vmul.f32 %v1780, %v1688
    %1784 = vrot.lane.b32.xlu0 %v1781, 32
    %v1785 = vpop.permute.xlu0 %1784
    %v1787 = vmul.f32 %v1780, %v1785
    %1789 = vrot.lane.b32.xlu0 %v1787, 32
    %v1790 = vpop.permute.xlu0 %1789
    %v1792 = vadd.f32 %v1782, %v1790
    %v1793 = vtanh.pop %v1792
    %1795 = vrot.lane.b32.xlu0 %v1793, 32
    %v1796 = vpop.permute.xlu0 %1795
    %v1798 = vmul.f32 %v1780, %v1796
    %v1799 = vrot.slane %v476, 1
    %v1801 = vrot.slane %v882, 7
    %v1803 = vrot.slane %v1085, 6
    %v1805 = vrot.slane %v1288, 5
    %v1807 = vrot.slane %v1491, 4
    %v1809 = vrot.slane %v1694, 3
    %v1812 = vrot.slane %v1798, 2
    %v1814 = vsel %vm96, %v1799, %v679
    %vm1815 = vcmask 1041408
    %v1816 = vsel %vm1815, %v1814, %v1801
    %vm1817 = vcmask 1042432
    %v1818 = vsel %vm1817, %v1816, %v1803
    %vm1819 = vcmask 1043456
    %v1820 = vsel %vm1819, %v1818, %v1805
    %vm1821 = vcmask 1044480
    %v1822 = vsel %vm1821, %v1820, %v1807
    %vm1823 = vcmask 1045504
    %v1824 = vsel %vm1823, %v1822, %v1809
    %vm1825 = vcmask 1046528
    %v1826 = vsel %vm1825, %v1824, %v1812
    %v1828 = vlaneseq
    %v1829 = vshrl.u32 %v1828, 7
    %v1830 = vsub.s32 0, %v1829
    %v1831 = vrot.slane %v86, %v1830
    %1832 = vrot.lane.b32.xlu0 %v1831, 64
    %v1833 = vpop.permute.xlu0 %1832
    %v1835 = vmul.f32 %v1826, %v1833
    %1837 = vrot.lane.b32.xlu0 %v1835, 64
    %v1838 = vpop.permute.xlu0 %1837
    %v1840 = vsel %vm168, %v1838, 0.0
    %1841 = vadd.xlane.f32.xlu0 %v1840
    %v1842 = vpop.xlane.xlu0 %1841
    %v1843 = vld [vmem:[#allocation2] sm:$0x1]
    %v1845 = vlaneseq
    %v1846 = vshrl.u32 %v1845, 7
    %v1847 = vsub.s32 0, %v1846
    %v1848 = vrot.slane %v1843, %v1847
    %v1850 = vadd.f32 %v1842, %v1848
    %vm1851 = vcmask 7168
    %1852 = vst.msk [vmem:[%s6] sm:$0xff] %vm1851, %v1850
    // Predicated region
    $region38: #{tpu_custom_call.1} parent=1 // pred_check
      _
    $region39: #{tpu_custom_call.1} parent=1 // pred_check_branch
      %1854 = sbr.rel (0) target = $region41
    $region40: #{tpu_custom_call.1} parent=1 // pred_region
      _
    $region41: #{tpu_custom_call.1} parent=1 // pred_fallthru
      _
    // Predicated region
    $region42: #{tpu_custom_call.1} parent=1 // pred_check
      _
    $region43: #{tpu_custom_call.1} parent=1 // pred_check_branch
      %1856 = sbr.rel (0) target = $region45
    $region44: #{tpu_custom_call.1} parent=1 // pred_region
      _
    $region45: #{tpu_custom_call.1} parent=1 // pred_fallthru
      _
    %1857 = vsyncpa [#allocation4], 1
    %1858 = vsyncpa [#allocation8], 1
    %1859 = vsyncpa [#allocation5], 1

</llo_original>
